<compile_context>
chip_gen: v7x
topology: tpu7x:2x2x1
jax: 0.10.0
libtpu: 0.0.40
codegen_flags: <defaults>
</compile_context>

<pallas_src>
import functools

import jax
import jax.numpy as jnp
from jax import lax
from jax.experimental import pallas as pl
from jax.experimental.pallas import tpu as pltpu

K_IN = 784            # feature dim of the PyTorch module
K_PAD = 896           # 784 rounded up to a multiple of 128 (lane aligned)
N_CLASSES = 10
N_PAD = 128           # classifier head padded to a lane-dense width
DIMS = [K_IN, 512, 256, 128, N_CLASSES]
DEFAULT_TB_CAP = 1024  # max batch-tile rows (tunable; up to ~2048 fits 32 MiB VMEM)


def _round_up(x, m):
    return ((x + m - 1) // m) * m


def _choose_tb(batch, cap):
    """Pick a batch tile: minimal padding, >=2 (even) grid steps, rows <= cap."""
    b8 = _round_up(max(batch, 8), 8)
    if b8 <= 8:
        return 8
    n_steps = max(2, pl.cdiv(b8, cap))   # >=2 steps -> both TCs on v7x
    if n_steps % 2:
        n_steps += 1                     # even step count -> balanced TC split
    return _round_up(pl.cdiv(b8, n_steps), 8)


def mlp_kernel(x_ref,
               w1_ref, b1_ref,
               w2_ref, b2_ref,
               w3_ref, b3_ref,
               w4_ref, b4_ref,
               out_ref):
    # Layer 1: bf16 x bf16 matmul on the MXU, f32 accumulation; elementwise in f32.
    h = jnp.dot(x_ref[...], w1_ref[...], preferred_element_type=jnp.float32)
    h = jnp.maximum(h + b1_ref[...], 0.0)

    # Layer 2.
    h = jnp.dot(h.astype(jnp.bfloat16), w2_ref[...],
                preferred_element_type=jnp.float32)
    h = jnp.maximum(h + b2_ref[...], 0.0)

    # Layer 3.
    h = jnp.dot(h.astype(jnp.bfloat16), w3_ref[...],
                preferred_element_type=jnp.float32)
    h = jnp.maximum(h + b3_ref[...], 0.0)

    # Classifier head (padded to 128 lanes) + softmax over real classes
    # (axis=1), matching nn.Softmax(dim=1).  Padded logit lanes -> -inf so they
    # contribute exp(..)=0 to the denominator and 0 to the output.
    logits = jnp.dot(h.astype(jnp.bfloat16), w4_ref[...],
                     preferred_element_type=jnp.float32)
    logits = logits + b4_ref[...]
    col = lax.broadcasted_iota(jnp.int32, logits.shape, 1)
    logits = jnp.where(col < N_CLASSES, logits, -jnp.inf)
    logits = logits - jnp.max(logits, axis=1, keepdims=True)   # f32 XLU reductions
    e = jnp.exp(logits)
    out_ref[...] = e / jnp.sum(e, axis=1, keepdims=True)       # exact softmax


@functools.partial(jax.jit, static_argnames=("tb",))
def mlp_forward(x, params, *, tb=None):
    """x: (B, 784) float32.  params: dict of (in,out) f32 weights and (1,out) f32 biases."""
    B = x.shape[0]
    if tb is None:
        tb = _choose_tb(B, DEFAULT_TB_CAP)
    b_pad = _round_up(max(B, tb), tb)

    # Pad batch to a tile multiple and K from 784 -> 896 (zeros don't change the
    # matmul), cast the streaming operand to bf16.
    x_p = jnp.pad(x, ((0, b_pad - B), (0, K_PAD - K_IN))).astype(jnp.bfloat16)

    w1 = jnp.pad(params["w1"], ((0, K_PAD - K_IN), (0, 0))).astype(jnp.bfloat16)
    w2 = params["w2"].astype(jnp.bfloat16)
    w3 = params["w3"].astype(jnp.bfloat16)
    # Head padded to 128 output lanes (zeros; kernel masks these lanes to -inf).
    w4 = jnp.pad(params["w4"],
                 ((0, 0), (0, N_PAD - N_CLASSES))).astype(jnp.bfloat16)
    b1, b2, b3 = params["b1"], params["b2"], params["b3"]          # stay f32
    b4 = jnp.pad(params["b4"], ((0, 0), (0, N_PAD - N_CLASSES)))   # stays f32

    grid = (b_pad // tb,)
    const = lambda i: (0, 0)   # weights/biases: same block every step -> VMEM-resident

    in_specs = [
        pl.BlockSpec((tb, K_PAD), lambda i: (i, 0)),          # x tile streams per step
        pl.BlockSpec((K_PAD, 512), const), pl.BlockSpec((1, 512), const),
        pl.BlockSpec((512, 256), const),   pl.BlockSpec((1, 256), const),
        pl.BlockSpec((256, 128), const),   pl.BlockSpec((1, 128), const),
        pl.BlockSpec((128, N_PAD), const), pl.BlockSpec((1, N_PAD), const),
    ]
    out_specs = pl.BlockSpec((tb, N_PAD), lambda i: (i, 0))   # lane-dense output

    flops = 2 * b_pad * (K_PAD * 512 + 512 * 256 + 256 * 128 + 128 * N_PAD)
    bytes_accessed = (
        x_p.size * 2
        + (w1.size + w2.size + w3.size + w4.size) * 2
        + (b1.size + b2.size + b3.size + b4.size) * 4
        + b_pad * N_PAD * 4)
    cost = pl.CostEstimate(flops=flops,
                           transcendentals=b_pad * N_PAD,
                           bytes_accessed=bytes_accessed)

    out = pl.pallas_call(
        mlp_kernel,
        out_shape=jax.ShapeDtypeStruct((b_pad, N_PAD), jnp.float32),
        grid=grid,
        in_specs=in_specs,
        out_specs=out_specs,
        compiler_params=pltpu.CompilerParams(
            dimension_semantics=("parallel",),       # batch axis -> both TCs on v7x
            vmem_limit_bytes=32 * 1024 * 1024),      # raise v5e's 16 MiB scoped default
        cost_estimate=cost,
    )(x_p, w1, b1, w2, b2, w3, b3, w4, b4)

    return out[:B, :N_CLASSES]


def init_params(key):
    """Deterministic init matching the PyTorch module's layer shapes."""
    params = {}
    for i, (d_in, d_out) in enumerate(zip(DIMS[:-1], DIMS[1:]), start=1):
        key, kw, kb = jax.random.split(key, 3)
        bound = 1.0 / (d_in ** 0.5)  # same scale family as torch's default init
        params[f"w{i}"] = jax.random.uniform(
            kw, (d_in, d_out), jnp.float32, minval=-bound, maxval=bound)
        params[f"b{i}"] = jax.random.uniform(
            kb, (1, d_out), jnp.float32, minval=-bound, maxval=bound)
    return params


def mlp_reference_f32(x, params):
    """Plain-JAX f32 reference (exact module semantics)."""
    h = jnp.maximum(x @ params["w1"] + params["b1"], 0.0)
    h = jnp.maximum(h @ params["w2"] + params["b2"], 0.0)
    h = jnp.maximum(h @ params["w3"] + params["b3"], 0.0)
    logits = h @ params["w4"] + params["b4"]
    return jax.nn.softmax(logits, axis=1)


def mlp_reference_bf16(x, params):
    """Reference that mimics the kernel's bf16 operand / f32 accumulation path."""
    def dot16(a, w):
        return jnp.dot(a.astype(jnp.bfloat16), w.astype(jnp.bfloat16),
                       preferred_element_type=jnp.float32)
    h = jnp.maximum(dot16(x, params["w1"]) + params["b1"], 0.0)
    h = jnp.maximum(dot16(h, params["w2"]) + params["b2"], 0.0)
    h = jnp.maximum(dot16(h, params["w3"]) + params["b3"], 0.0)
    logits = dot16(h, params["w4"]) + params["b4"]
    return jax.nn.softmax(logits, axis=1)


if __name__ == "__main__":
    key = jax.random.PRNGKey(0)
    key, kx = jax.random.split(key)

    B = 16  # small batch; auto-tiling picks tb=8 -> a 2-step batch grid
    x = jax.random.normal(kx, (B, K_IN), dtype=jnp.float32)
    params = init_params(key)

    out = mlp_forward(x, params)
    jax.block_until_ready(out)

    assert out.shape == (B, N_CLASSES)

    # Tight check against a reference that uses the same bf16 operand path.
    ref16 = mlp_reference_bf16(x, params)
    assert jnp.allclose(out, ref16, atol=5e-3, rtol=5e-3), "mismatch vs bf16 reference"

    # Loose check against the exact f32 module semantics (bf16 weight quantization).
    ref32 = mlp_reference_f32(x, params)
    assert jnp.allclose(out, ref32, atol=5e-2, rtol=5e-2), "mismatch vs f32 reference"

    # Exact softmax divide: rows sum to 1 within f32 rounding.
    assert jnp.allclose(jnp.sum(out, axis=1), jnp.ones((B,)), atol=1e-5)

    print("KERNEL_OK")
</pallas_src>

<mosaic_0001>
module attributes {stable_mosaic.version = 11 : i64} {
  func.func @mlp_kernel(%arg0: i32, %arg1: memref<8x896xbf16, #tpu.memory_space<vmem>>, %arg2: memref<896x512xbf16, #tpu.memory_space<vmem>>, %arg3: memref<1x512xf32, #tpu.memory_space<vmem>>, %arg4: memref<512x256xbf16, #tpu.memory_space<vmem>>, %arg5: memref<1x256xf32, #tpu.memory_space<vmem>>, %arg6: memref<256x128xbf16, #tpu.memory_space<vmem>>, %arg7: memref<1x128xf32, #tpu.memory_space<vmem>>, %arg8: memref<128x128xbf16, #tpu.memory_space<vmem>>, %arg9: memref<1x128xf32, #tpu.memory_space<vmem>>, %arg10: memref<8x128xf32, #tpu.memory_space<vmem>>) attributes {dimension_semantics = [#tpu.dimension_semantics<parallel>], iteration_bounds = array<i64: 2>, scalar_prefetch = 0 : i64, scratch_operands = 0 : i64, tpu.core_type = #tpu.core_type<tc>, window_params = [{transform_indices = @transform_0, window_bounds = array<i64: 8, 896>}, {pipeline_mode = #tpu.pipeline_mode<synchronous>, transform_indices = @transform_1, window_bounds = array<i64: 896, 512>}, {pipeline_mode = #tpu.pipeline_mode<synchronous>, transform_indices = @transform_2, window_bounds = array<i64: 1, 512>}, {pipeline_mode = #tpu.pipeline_mode<synchronous>, transform_indices = @transform_3, window_bounds = array<i64: 512, 256>}, {pipeline_mode = #tpu.pipeline_mode<synchronous>, transform_indices = @transform_4, window_bounds = array<i64: 1, 256>}, {pipeline_mode = #tpu.pipeline_mode<synchronous>, transform_indices = @transform_5, window_bounds = array<i64: 256, 128>}, {pipeline_mode = #tpu.pipeline_mode<synchronous>, transform_indices = @transform_6, window_bounds = array<i64: 1, 128>}, {pipeline_mode = #tpu.pipeline_mode<synchronous>, transform_indices = @transform_7, window_bounds = array<i64: 128, 128>}, {pipeline_mode = #tpu.pipeline_mode<synchronous>, transform_indices = @transform_8, window_bounds = array<i64: 1, 128>}, {transform_indices = @transform_9, window_bounds = array<i64: 8, 128>}]} {
    %c0 = arith.constant 0 : index
    %c0_0 = arith.constant 0 : index
    %0 = vector.load %arg1[%c0, %c0_0] : memref<8x896xbf16, #tpu.memory_space<vmem>>, vector<8x896xbf16>
    %c0_1 = arith.constant 0 : index
    %c0_2 = arith.constant 0 : index
    %1 = vector.load %arg2[%c0_1, %c0_2] : memref<896x512xbf16, #tpu.memory_space<vmem>>, vector<896x512xbf16>
    %cst = arith.constant dense<0.000000e+00> : vector<8x512xf32>
    %2 = tpu.matmul %0, %1, %cst {dimension_numbers = #tpu.dot_dimension_numbers<[1], [0], [0], [1], [0, 0, 1, 1], [], []>} : vector<8x896xbf16>, vector<896x512xbf16>, vector<8x512xf32> -> vector<8x512xf32>
    %c0_3 = arith.constant 0 : index
    %c0_4 = arith.constant 0 : index
    %3 = vector.load %arg3[%c0_3, %c0_4] : memref<1x512xf32, #tpu.memory_space<vmem>>, vector<1x512xf32>
    %4 = vector.broadcast %3 : vector<1x512xf32> to vector<8x512xf32>
    %5 = arith.addf %2, %4 : vector<8x512xf32>
    %cst_5 = arith.constant 0.000000e+00 : f32
    %6 = vector.broadcast %cst_5 : f32 to vector<8x512xf32>
    %7 = arith.maximumf %5, %6 : vector<8x512xf32>
    %8 = arith.truncf %7 : vector<8x512xf32> to vector<8x512xbf16>
    %c0_6 = arith.constant 0 : index
    %c0_7 = arith.constant 0 : index
    %9 = vector.load %arg4[%c0_6, %c0_7] : memref<512x256xbf16, #tpu.memory_space<vmem>>, vector<512x256xbf16>
    %cst_8 = arith.constant dense<0.000000e+00> : vector<8x256xf32>
    %10 = tpu.matmul %8, %9, %cst_8 {dimension_numbers = #tpu.dot_dimension_numbers<[1], [0], [0], [1], [0, 0, 1, 1], [], []>} : vector<8x512xbf16>, vector<512x256xbf16>, vector<8x256xf32> -> vector<8x256xf32>
    %c0_9 = arith.constant 0 : index
    %c0_10 = arith.constant 0 : index
    %11 = vector.load %arg5[%c0_9, %c0_10] : memref<1x256xf32, #tpu.memory_space<vmem>>, vector<1x256xf32>
    %12 = vector.broadcast %11 : vector<1x256xf32> to vector<8x256xf32>
    %13 = arith.addf %10, %12 : vector<8x256xf32>
    %cst_11 = arith.constant 0.000000e+00 : f32
    %14 = vector.broadcast %cst_11 : f32 to vector<8x256xf32>
    %15 = arith.maximumf %13, %14 : vector<8x256xf32>
    %16 = arith.truncf %15 : vector<8x256xf32> to vector<8x256xbf16>
    %c0_12 = arith.constant 0 : index
    %c0_13 = arith.constant 0 : index
    %17 = vector.load %arg6[%c0_12, %c0_13] : memref<256x128xbf16, #tpu.memory_space<vmem>>, vector<256x128xbf16>
    %cst_14 = arith.constant dense<0.000000e+00> : vector<8x128xf32>
    %18 = tpu.matmul %16, %17, %cst_14 {dimension_numbers = #tpu.dot_dimension_numbers<[1], [0], [0], [1], [0, 0, 1, 1], [], []>} : vector<8x256xbf16>, vector<256x128xbf16>, vector<8x128xf32> -> vector<8x128xf32>
    %c0_15 = arith.constant 0 : index
    %c0_16 = arith.constant 0 : index
    %19 = vector.load %arg7[%c0_15, %c0_16] : memref<1x128xf32, #tpu.memory_space<vmem>>, vector<1x128xf32>
    %20 = vector.broadcast %19 : vector<1x128xf32> to vector<8x128xf32>
    %21 = arith.addf %18, %20 : vector<8x128xf32>
    %cst_17 = arith.constant 0.000000e+00 : f32
    %22 = vector.broadcast %cst_17 : f32 to vector<8x128xf32>
    %23 = arith.maximumf %21, %22 : vector<8x128xf32>
    %24 = arith.truncf %23 : vector<8x128xf32> to vector<8x128xbf16>
    %c0_18 = arith.constant 0 : index
    %c0_19 = arith.constant 0 : index
    %25 = vector.load %arg8[%c0_18, %c0_19] : memref<128x128xbf16, #tpu.memory_space<vmem>>, vector<128x128xbf16>
    %cst_20 = arith.constant dense<0.000000e+00> : vector<8x128xf32>
    %26 = tpu.matmul %24, %25, %cst_20 {dimension_numbers = #tpu.dot_dimension_numbers<[1], [0], [0], [1], [0, 0, 1, 1], [], []>} : vector<8x128xbf16>, vector<128x128xbf16>, vector<8x128xf32> -> vector<8x128xf32>
    %c0_21 = arith.constant 0 : index
    %c0_22 = arith.constant 0 : index
    %27 = vector.load %arg9[%c0_21, %c0_22] : memref<1x128xf32, #tpu.memory_space<vmem>>, vector<1x128xf32>
    %28 = vector.broadcast %27 : vector<1x128xf32> to vector<8x128xf32>
    %29 = arith.addf %26, %28 : vector<8x128xf32>
    %30 = tpu.iota {dimensions = array<i32: 1>} : vector<8x128xi32>
    %c10_i32 = arith.constant 10 : i32
    %31 = vector.broadcast %c10_i32 : i32 to vector<8x128xi32>
    %32 = arith.cmpi slt, %30, %31 : vector<8x128xi32>
    %cst_23 = arith.constant 0xFF800000 : f32
    %33 = vector.broadcast %cst_23 : f32 to vector<8x128xf32>
    %34 = arith.select %32, %29, %33 : vector<8x128xi1>, vector<8x128xf32>
    %cst_24 = arith.constant dense<0xFF800000> : vector<8xf32>
    %35 = vector.multi_reduction <maximumf>, %34, %cst_24 [1] : vector<8x128xf32> to vector<8xf32>
    %36 = vector.shape_cast %35 : vector<8xf32> to vector<8x1xf32>
    %37 = vector.broadcast %36 : vector<8x1xf32> to vector<8x128xf32>
    %38 = arith.subf %34, %37 : vector<8x128xf32>
    %39 = math.exp %38 : vector<8x128xf32>
    %cst_25 = arith.constant dense<0.000000e+00> : vector<8xf32>
    %40 = vector.multi_reduction <add>, %39, %cst_25 [1] : vector<8x128xf32> to vector<8xf32>
    %41 = vector.shape_cast %40 : vector<8xf32> to vector<8x1xf32>
    %42 = vector.broadcast %41 : vector<8x1xf32> to vector<8x128xf32>
    %43 = arith.divf %39, %42 : vector<8x128xf32>
    %c0_26 = arith.constant 0 : index
    %c0_27 = arith.constant 0 : index
    %44 = vector.load %arg10[%c0_26, %c0_27] : memref<8x128xf32, #tpu.memory_space<vmem>>, vector<8x128xf32>
    tpu.vector_store %arg10[%c0_26, %c0_27], %43 {strides = array<i32>} : memref<8x128xf32, #tpu.memory_space<vmem>>, vector<8x128xf32>,
    return
  }
  func.func @transform_0(%arg0: i32) -> (i32, i32) {
    %c0_i32 = arith.constant 0 : i32
    %c0_i32_0 = arith.constant 0 : i32
    return %arg0, %c0_i32 : i32, i32
  }
  func.func @transform_1(%arg0: i32) -> (i32, i32) {
    %c0_i32 = arith.constant 0 : i32
    %c0_i32_0 = arith.constant 0 : i32
    %c0_i32_1 = arith.constant 0 : i32
    return %c0_i32, %c0_i32_0 : i32, i32
  }
  func.func @transform_2(%arg0: i32) -> (i32, i32) {
    %c0_i32 = arith.constant 0 : i32
    %c0_i32_0 = arith.constant 0 : i32
    %c0_i32_1 = arith.constant 0 : i32
    return %c0_i32, %c0_i32_0 : i32, i32
  }
  func.func @transform_3(%arg0: i32) -> (i32, i32) {
    %c0_i32 = arith.constant 0 : i32
    %c0_i32_0 = arith.constant 0 : i32
    %c0_i32_1 = arith.constant 0 : i32
    return %c0_i32, %c0_i32_0 : i32, i32
  }
  func.func @transform_4(%arg0: i32) -> (i32, i32) {
    %c0_i32 = arith.constant 0 : i32
    %c0_i32_0 = arith.constant 0 : i32
    %c0_i32_1 = arith.constant 0 : i32
    return %c0_i32, %c0_i32_0 : i32, i32
  }
  func.func @transform_5(%arg0: i32) -> (i32, i32) {
    %c0_i32 = arith.constant 0 : i32
    %c0_i32_0 = arith.constant 0 : i32
    %c0_i32_1 = arith.constant 0 : i32
    return %c0_i32, %c0_i32_0 : i32, i32
  }
  func.func @transform_6(%arg0: i32) -> (i32, i32) {
    %c0_i32 = arith.constant 0 : i32
    %c0_i32_0 = arith.constant 0 : i32
    %c0_i32_1 = arith.constant 0 : i32
    return %c0_i32, %c0_i32_0 : i32, i32
  }
  func.func @transform_7(%arg0: i32) -> (i32, i32) {
    %c0_i32 = arith.constant 0 : i32
    %c0_i32_0 = arith.constant 0 : i32
    %c0_i32_1 = arith.constant 0 : i32
    return %c0_i32, %c0_i32_0 : i32, i32
  }
  func.func @transform_8(%arg0: i32) -> (i32, i32) {
    %c0_i32 = arith.constant 0 : i32
    %c0_i32_0 = arith.constant 0 : i32
    %c0_i32_1 = arith.constant 0 : i32
    return %c0_i32, %c0_i32_0 : i32, i32
  }
  func.func @transform_9(%arg0: i32) -> (i32, i32) {
    %c0_i32 = arith.constant 0 : i32
    %c0_i32_0 = arith.constant 0 : i32
    return %arg0, %c0_i32 : i32, i32
  }
}

</mosaic_0001>

<llo_original>
// kernel: mlp_forward.1
$region0: #{mlp_forward.1}
  #allocation0 [shape = 'u32[]', space=smem, size = 0x4, offset = 0x4, fixed_abs, tag = 'smem constant byte address 0x4 - core index']
  #allocation1 [shape = 'u32[144,128]{1,0:T(1,128)}', space=vmem, size = 0x12000, scoped, tag = 'internal scratch']
  %s0 = inlined_call_operand.vmem [shape: bf16[16,896], index: 0, kind: input, shape index: {}]
  %s1 = inlined_call_operand.vmem [shape: bf16[896,512], index: 1, kind: input, shape index: {}]
  %s2 = inlined_call_operand.vmem [shape: f32[1,512], index: 2, kind: input, shape index: {}]
  %s3 = inlined_call_operand.vmem [shape: bf16[512,256], index: 3, kind: input, shape index: {}]
  %s4 = inlined_call_operand.vmem [shape: f32[1,256], index: 4, kind: input, shape index: {}]
  %s5 = inlined_call_operand.vmem [shape: bf16[256,128], index: 5, kind: input, shape index: {}]
  %s6 = inlined_call_operand.vmem [shape: f32[1,128], index: 6, kind: input, shape index: {}]
  %s7 = inlined_call_operand.vmem [shape: bf16[128,128], index: 7, kind: input, shape index: {}]
  %s8 = inlined_call_operand.vmem [shape: f32[1,128], index: 8, kind: input, shape index: {}]
  %s9 = inlined_call_operand.hbm [shape: f32[16,128], index: 9, kind: output, shape index: {}]
  %s10 = sld [smem:[#allocation0]]
  $region69: #{mlp_forward.1} parent=0
    _
  %s12 = ssub.s32 1, %s10
  %s13 = scalar_select 0, %s12, %s10
  $region1: #{mlp_forward.1} parent=0
    #allocation2 [shape = 'u8[8192]{0}', space=vmem, size = 0x2000, scoped, tag = 'output window, operand 0']
    #allocation3 [shape = 's32[2]{0}', space=sflag, size = 0x8, scoped, tag = 'scoped memory for mlp_forward.1']
    %14 = vsyncpa [#allocation3], 0
    %s15 = scalar_lea.sflag [#allocation3], 1
    %16 = vsyncpa %s15, 0
    loop: start=0, step=1, limit=4
    $region2: #{mlp_forward.1} parent=1 // loop_pre_header
      _
    $region3: #{mlp_forward.1} parent=1 // loop_header
      %s18 = sphi 0, %s22
      %p19 = scmp.ge.s32.totalorder %s18, 4
      %s28 = sphi 0, %s30
      %s31 = sphi 0, %s28
      %s32 = sphi 0, %s31
      %s48 = sphi 0, %s32
      %s52 = sphi 0, %s52
      %s54 = sphi 0, %s52
      %s55 = sphi 0, %s54
      %s69 = sphi 0, %s55
      %s73 = sphi 0, %s73
      %s75 = sphi 0, %s73
      %s76 = sphi 0, %s75
      %s90 = sphi 0, %s76
      %s94 = sphi 0, %s94
      %s96 = sphi 0, %s94
      %s97 = sphi 0, %s96
      %s111 = sphi 0, %s97
      %s115 = sphi 0, %s115
      %s117 = sphi 0, %s115
      %s118 = sphi 0, %s117
      %s132 = sphi 0, %s118
      %s136 = sphi 0, %s136
      %s138 = sphi 0, %s136
      %s139 = sphi 0, %s138
      %s153 = sphi 0, %s139
      %s157 = sphi 0, %s157
      %s159 = sphi 0, %s157
      %s160 = sphi 0, %s159
      %s174 = sphi 0, %s160
      %s178 = sphi 0, %s178
      %s180 = sphi 0, %s178
      %s181 = sphi 0, %s180
      %s195 = sphi 0, %s181
      %s199 = sphi 0, %s199
      %s201 = sphi 0, %s199
      %s202 = sphi 0, %s201
      %s216 = sphi 0, %s202
      %s222 = sphi 0, %s224
      %s225 = sphi 0, %s222
      %s226 = sphi 0, %s225
      %s242 = sphi 0, %s226
    $region4: #{mlp_forward.1} parent=1 // loop_header_branch
      %21 = sbr.rel (%p19) target = $region8
    $region5: #{mlp_forward.1} parent=1 // loop_body
      %s23 = ssub.s32 %s18, 1
      %s24 = ssub.s32 %s18, 2
      %s25 = sadd.s32 %s18, 1
      %s26 = ssub.s32 %s18, %s25
      %p27 = scmp.eq.s32.totalorder %s26, 0
      %s29 = sadd.s32 %s28, 1
      %s30 = scalar_select %p27, %s28, %s29
      %p33 = pneg %p27
      %p34 = scmp.eq.s32.totalorder %s18, 1
      %p35 = por %p33, %p34
      %p36 = scmp.ne.s32.totalorder %s28, %s31
      %p37 = scmp.eq.s32.totalorder %s18, 0
      %p38 = por %p36, %p37
      %p39 = scmp.ne.s32.totalorder %s28, %s31
      %p40 = scmp.eq.s32.totalorder %s23, 1
      %p41 = por %p39, %p40
      %p42 = scmp.ne.s32.totalorder %s31, %s32
      %p43 = scmp.eq.s32.totalorder %s23, 0
      %p44 = por %p42, %p43
      %p45 = scmp.ne.s32.totalorder %s31, %s32
      %p46 = scmp.eq.s32.totalorder %s24, 1
      %p47 = por %p45, %p46
      %p49 = scmp.ne.s32.totalorder %s32, %s48
      %p50 = scmp.eq.s32.totalorder %s24, 0
      %p51 = por %p49, %p50
      %s53 = sadd.s32 %s52, 1
      %p56 = scmp.eq.s32.totalorder %s18, 1
      %p57 = scmp.ne.s32.totalorder %s52, %s54
      %p58 = scmp.eq.s32.totalorder %s18, 0
      %p59 = por %p57, %p58
      %p60 = scmp.ne.s32.totalorder %s52, %s54
      %p61 = scmp.eq.s32.totalorder %s23, 1
      %p62 = por %p60, %p61
      %p63 = scmp.ne.s32.totalorder %s54, %s55
      %p64 = scmp.eq.s32.totalorder %s23, 0
      %p65 = por %p63, %p64
      %p66 = scmp.ne.s32.totalorder %s54, %s55
      %p67 = scmp.eq.s32.totalorder %s24, 1
      %p68 = por %p66, %p67
      %p70 = scmp.ne.s32.totalorder %s55, %s69
      %p71 = scmp.eq.s32.totalorder %s24, 0
      %p72 = por %p70, %p71
      %s74 = sadd.s32 %s73, 1
      %p77 = scmp.eq.s32.totalorder %s18, 1
      %p78 = scmp.ne.s32.totalorder %s73, %s75
      %p79 = scmp.eq.s32.totalorder %s18, 0
      %p80 = por %p78, %p79
      %p81 = scmp.ne.s32.totalorder %s73, %s75
      %p82 = scmp.eq.s32.totalorder %s23, 1
      %p83 = por %p81, %p82
      %p84 = scmp.ne.s32.totalorder %s75, %s76
      %p85 = scmp.eq.s32.totalorder %s23, 0
      %p86 = por %p84, %p85
      %p87 = scmp.ne.s32.totalorder %s75, %s76
      %p88 = scmp.eq.s32.totalorder %s24, 1
      %p89 = por %p87, %p88
      %p91 = scmp.ne.s32.totalorder %s76, %s90
      %p92 = scmp.eq.s32.totalorder %s24, 0
      %p93 = por %p91, %p92
      %s95 = sadd.s32 %s94, 1
      %p98 = scmp.eq.s32.totalorder %s18, 1
      %p99 = scmp.ne.s32.totalorder %s94, %s96
      %p100 = scmp.eq.s32.totalorder %s18, 0
      %p101 = por %p99, %p100
      %p102 = scmp.ne.s32.totalorder %s94, %s96
      %p103 = scmp.eq.s32.totalorder %s23, 1
      %p104 = por %p102, %p103
      %p105 = scmp.ne.s32.totalorder %s96, %s97
      %p106 = scmp.eq.s32.totalorder %s23, 0
      %p107 = por %p105, %p106
      %p108 = scmp.ne.s32.totalorder %s96, %s97
      %p109 = scmp.eq.s32.totalorder %s24, 1
      %p110 = por %p108, %p109
      %p112 = scmp.ne.s32.totalorder %s97, %s111
      %p113 = scmp.eq.s32.totalorder %s24, 0
      %p114 = por %p112, %p113
      %s116 = sadd.s32 %s115, 1
      %p119 = scmp.eq.s32.totalorder %s18, 1
      %p120 = scmp.ne.s32.totalorder %s115, %s117
      %p121 = scmp.eq.s32.totalorder %s18, 0
      %p122 = por %p120, %p121
      %p123 = scmp.ne.s32.totalorder %s115, %s117
      %p124 = scmp.eq.s32.totalorder %s23, 1
      %p125 = por %p123, %p124
      %p126 = scmp.ne.s32.totalorder %s117, %s118
      %p127 = scmp.eq.s32.totalorder %s23, 0
      %p128 = por %p126, %p127
      %p129 = scmp.ne.s32.totalorder %s117, %s118
      %p130 = scmp.eq.s32.totalorder %s24, 1
      %p131 = por %p129, %p130
      %p133 = scmp.ne.s32.totalorder %s118, %s132
      %p134 = scmp.eq.s32.totalorder %s24, 0
      %p135 = por %p133, %p134
      %s137 = sadd.s32 %s136, 1
      %p140 = scmp.eq.s32.totalorder %s18, 1
      %p141 = scmp.ne.s32.totalorder %s136, %s138
      %p142 = scmp.eq.s32.totalorder %s18, 0
      %p143 = por %p141, %p142
      %p144 = scmp.ne.s32.totalorder %s136, %s138
      %p145 = scmp.eq.s32.totalorder %s23, 1
      %p146 = por %p144, %p145
      %p147 = scmp.ne.s32.totalorder %s138, %s139
      %p148 = scmp.eq.s32.totalorder %s23, 0
      %p149 = por %p147, %p148
      %p150 = scmp.ne.s32.totalorder %s138, %s139
      %p151 = scmp.eq.s32.totalorder %s24, 1
      %p152 = por %p150, %p151
      %p154 = scmp.ne.s32.totalorder %s139, %s153
      %p155 = scmp.eq.s32.totalorder %s24, 0
      %p156 = por %p154, %p155
      %s158 = sadd.s32 %s157, 1
      %p161 = scmp.eq.s32.totalorder %s18, 1
      %p162 = scmp.ne.s32.totalorder %s157, %s159
      %p163 = scmp.eq.s32.totalorder %s18, 0
      %p164 = por %p162, %p163
      %p165 = scmp.ne.s32.totalorder %s157, %s159
      %p166 = scmp.eq.s32.totalorder %s23, 1
      %p167 = por %p165, %p166
      %p168 = scmp.ne.s32.totalorder %s159, %s160
      %p169 = scmp.eq.s32.totalorder %s23, 0
      %p170 = por %p168, %p169
      %p171 = scmp.ne.s32.totalorder %s159, %s160
      %p172 = scmp.eq.s32.totalorder %s24, 1
      %p173 = por %p171, %p172
      %p175 = scmp.ne.s32.totalorder %s160, %s174
      %p176 = scmp.eq.s32.totalorder %s24, 0
      %p177 = por %p175, %p176
      %s179 = sadd.s32 %s178, 1
      %p182 = scmp.eq.s32.totalorder %s18, 1
      %p183 = scmp.ne.s32.totalorder %s178, %s180
      %p184 = scmp.eq.s32.totalorder %s18, 0
      %p185 = por %p183, %p184
      %p186 = scmp.ne.s32.totalorder %s178, %s180
      %p187 = scmp.eq.s32.totalorder %s23, 1
      %p188 = por %p186, %p187
      %p189 = scmp.ne.s32.totalorder %s180, %s181
      %p190 = scmp.eq.s32.totalorder %s23, 0
      %p191 = por %p189, %p190
      %p192 = scmp.ne.s32.totalorder %s180, %s181
      %p193 = scmp.eq.s32.totalorder %s24, 1
      %p194 = por %p192, %p193
      %p196 = scmp.ne.s32.totalorder %s181, %s195
      %p197 = scmp.eq.s32.totalorder %s24, 0
      %p198 = por %p196, %p197
      %s200 = sadd.s32 %s199, 1
      %p203 = scmp.eq.s32.totalorder %s18, 1
      %p204 = scmp.ne.s32.totalorder %s199, %s201
      %p205 = scmp.eq.s32.totalorder %s18, 0
      %p206 = por %p204, %p205
      %p207 = scmp.ne.s32.totalorder %s199, %s201
      %p208 = scmp.eq.s32.totalorder %s23, 1
      %p209 = por %p207, %p208
      %p210 = scmp.ne.s32.totalorder %s201, %s202
      %p211 = scmp.eq.s32.totalorder %s23, 0
      %p212 = por %p210, %p211
      %p213 = scmp.ne.s32.totalorder %s201, %s202
      %p214 = scmp.eq.s32.totalorder %s24, 1
      %p215 = por %p213, %p214
      %p217 = scmp.ne.s32.totalorder %s202, %s216
      %p218 = scmp.eq.s32.totalorder %s24, 0
      %p219 = por %p217, %p218
      %s220 = ssub.s32 %s18, %s25
      %p221 = scmp.eq.s32.totalorder %s220, 0
      %s223 = sadd.s32 %s222, 1
      %s224 = scalar_select %p221, %s222, %s223
      %p227 = pneg %p221
      %p228 = scmp.eq.s32.totalorder %s18, 1
      %p229 = por %p227, %p228
      %p230 = scmp.ne.s32.totalorder %s222, %s225
      %p231 = scmp.eq.s32.totalorder %s18, 0
      %p232 = por %p230, %p231
      %p233 = scmp.ne.s32.totalorder %s222, %s225
      %p234 = scmp.eq.s32.totalorder %s23, 1
      %p235 = por %p233, %p234
      %p236 = scmp.ne.s32.totalorder %s225, %s226
      %p237 = scmp.eq.s32.totalorder %s23, 0
      %p238 = por %p236, %p237
      %p239 = scmp.ne.s32.totalorder %s225, %s226
      %p240 = scmp.eq.s32.totalorder %s24, 1
      %p241 = por %p239, %p240
      %p243 = scmp.ne.s32.totalorder %s226, %s242
      %p244 = scmp.eq.s32.totalorder %s24, 0
      %p245 = por %p243, %p244
      %p246 = scmp.le.s32.totalorder 1, %s18
      %p247 = scmp.lt.s32.totalorder %s18, 3
      %p248 = pnand %p246, %p247
      %p249 = pneg %p248
      // Predicated region
      $region9: #{mlp_forward.1} parent=5 // pred_check
        _
      $region10: #{mlp_forward.1} parent=5 // pred_check_branch
        %251 = sbr.rel (%p248) target = $region12
      $region11: #{mlp_forward.1} parent=5 // pred_region
        %s252 = ssub.s32 %s18, 1
        // Predicated region
        $region13: #{mlp_forward.1} parent=11 // pred_check
          %p253 = pneg %p65
        $region14: #{mlp_forward.1} parent=11 // pred_check_branch
          %255 = sbr.rel (%p253) target = $region16
        $region15: #{mlp_forward.1} parent=11 // pred_region
          _
        $region16: #{mlp_forward.1} parent=11 // pred_fallthru
          _
        // Predicated region
        $region17: #{mlp_forward.1} parent=11 // pred_check
          %p256 = pneg %p86
        $region18: #{mlp_forward.1} parent=11 // pred_check_branch
          %258 = sbr.rel (%p256) target = $region20
        $region19: #{mlp_forward.1} parent=11 // pred_region
          _
        $region20: #{mlp_forward.1} parent=11 // pred_fallthru
          _
        // Predicated region
        $region21: #{mlp_forward.1} parent=11 // pred_check
          %p259 = pneg %p107
        $region22: #{mlp_forward.1} parent=11 // pred_check_branch
          %261 = sbr.rel (%p259) target = $region24
        $region23: #{mlp_forward.1} parent=11 // pred_region
          _
        $region24: #{mlp_forward.1} parent=11 // pred_fallthru
          _
        // Predicated region
        $region25: #{mlp_forward.1} parent=11 // pred_check
          %p262 = pneg %p128
        $region26: #{mlp_forward.1} parent=11 // pred_check_branch
          %264 = sbr.rel (%p262) target = $region28
        $region27: #{mlp_forward.1} parent=11 // pred_region
          _
        $region28: #{mlp_forward.1} parent=11 // pred_fallthru
          _
        // Predicated region
        $region29: #{mlp_forward.1} parent=11 // pred_check
          %p265 = pneg %p149
        $region30: #{mlp_forward.1} parent=11 // pred_check_branch
          %267 = sbr.rel (%p265) target = $region32
        $region31: #{mlp_forward.1} parent=11 // pred_region
          _
        $region32: #{mlp_forward.1} parent=11 // pred_fallthru
          _
        // Predicated region
        $region33: #{mlp_forward.1} parent=11 // pred_check
          %p268 = pneg %p170
        $region34: #{mlp_forward.1} parent=11 // pred_check_branch
          %270 = sbr.rel (%p268) target = $region36
        $region35: #{mlp_forward.1} parent=11 // pred_region
          _
        $region36: #{mlp_forward.1} parent=11 // pred_fallthru
          _
        // Predicated region
        $region37: #{mlp_forward.1} parent=11 // pred_check
          %p271 = pneg %p191
        $region38: #{mlp_forward.1} parent=11 // pred_check_branch
          %273 = sbr.rel (%p271) target = $region40
        $region39: #{mlp_forward.1} parent=11 // pred_region
          _
        $region40: #{mlp_forward.1} parent=11 // pred_fallthru
          _
        // Predicated region
        $region41: #{mlp_forward.1} parent=11 // pred_check
          %p274 = pneg %p212
        $region42: #{mlp_forward.1} parent=11 // pred_check_branch
          %276 = sbr.rel (%p274) target = $region44
        $region43: #{mlp_forward.1} parent=11 // pred_region
          _
        $region44: #{mlp_forward.1} parent=11 // pred_fallthru
          _
      $region12: #{mlp_forward.1} parent=5 // pred_fallthru
        _
      %p277 = scmp.lt.s32.totalorder %s18, 2
      // Predicated region
      $region45: #{mlp_forward.1} parent=5 // pred_check
        %p278 = pneg %p277
      $region46: #{mlp_forward.1} parent=5 // pred_check_branch
        %280 = sbr.rel (%p278) target = $region48
      $region47: #{mlp_forward.1} parent=5 // pred_region
        // Predicated region
        $region49: #{mlp_forward.1} parent=47 // pred_check
          %p281 = pneg %p38
        $region50: #{mlp_forward.1} parent=47 // pred_check_branch
          %283 = sbr.rel (%p281) target = $region52
        $region51: #{mlp_forward.1} parent=47 // pred_region
          %p284 = scmp.lt.s32.totalorder %s18, 1
          %s285 = scalar_select %p284, %s18, 1
          %s286 = smul.addr %s285, 7
          %s287 = smul.addr %s286, 4
          %s288 = scalar_lea.vmem %s0, %s287
        $region52: #{mlp_forward.1} parent=47 // pred_fallthru
          _
      $region48: #{mlp_forward.1} parent=5 // pred_fallthru
        _
      %p289 = scmp.le.s32.totalorder 1, %s18
      %p290 = scmp.lt.s32.totalorder %s18, 3
      %p291 = pnand %p289, %p290
      %p292 = pneg %p291
      // Predicated region
      $region53: #{mlp_forward.1} parent=5 // pred_check
        _
      $region54: #{mlp_forward.1} parent=5 // pred_check_branch
        %294 = sbr.rel (%p291) target = $region56
      $region55: #{mlp_forward.1} parent=5 // pred_region
        %s295 = ssub.s32 %s18, 1
        %p296 = scmp.lt.s32.totalorder %s23, 1
        %s297 = scalar_select %p296, %s23, 1
        %s298 = smul.addr %s297, 7
        %s299 = smul.addr %s298, 4
        %s300 = scalar_lea.vmem %s0, %s299
        %p301 = pneg %p44
        %p302 = pneg %p41
        %p303 = pneg %p65
        %p304 = pneg %p62
        %p305 = pneg %p86
        %p306 = pneg %p83
        %p307 = pneg %p107
        %p308 = pneg %p104
        %p309 = pneg %p128
        %p310 = pneg %p125
        %p311 = pneg %p149
        %p312 = pneg %p146
        %p313 = pneg %p170
        %p314 = pneg %p167
        %p315 = pneg %p191
        %p316 = pneg %p188
        %p317 = pneg %p212
        %p318 = pneg %p209
        %p319 = pneg %p238
        %p320 = pneg %p235
        %s321 = sand.u32 %s225, 1
        %s322 = scalar_lea.sflag [#allocation3], %s321
        %s323 = sand.u32 %s225, 1
        %s324 = smul.addr %s323, 8
        %s325 = scalar_lea.vmem [#allocation2], %s324
        %p326 = scmp.lt.s32.totalorder %s23, 1
        %s327 = scalar_select %p326, %s23, 1
        %s328 = smul.addr %s327, 7
        %s329 = smul.addr %s328, 4
        %s330 = scalar_lea.vmem %s0, %s329
        %v332 = vld [vmem:[%s330] sm:$0xff]
        %v333 = vld [vmem:[%s330 + $0x8] sm:$0xff]
        %v334 = vld [vmem:[%s330 + $0x10] sm:$0xff]
        %v335 = vld [vmem:[%s330 + $0x18] sm:$0xf]
        %v336 = vld [vmem:[%s1] sm:$0xff]
        %v337 = vld [vmem:[%s1 + $0x8] sm:$0xff]
        %v338 = vld [vmem:[%s1 + $0x10] sm:$0xff]
        %v339 = vld [vmem:[%s1 + $0x18] sm:$0xff]
        %v340 = vld [vmem:[%s1 + $0x20] sm:$0xff]
        %v341 = vld [vmem:[%s1 + $0x28] sm:$0xff]
        %v342 = vld [vmem:[%s1 + $0x30] sm:$0xff]
        %v343 = vld [vmem:[%s1 + $0x38] sm:$0xff]
        %v344 = vld [vmem:[%s1 + $0x40] sm:$0xff]
        %v345 = vld [vmem:[%s1 + $0x48] sm:$0xff]
        %v346 = vld [vmem:[%s1 + $0x50] sm:$0xff]
        %v347 = vld [vmem:[%s1 + $0x58] sm:$0xff]
        %v348 = vld [vmem:[%s1 + $0x60] sm:$0xff]
        %v349 = vld [vmem:[%s1 + $0x68] sm:$0xff]
        %v350 = vld [vmem:[%s1 + $0x70] sm:$0xff]
        %v351 = vld [vmem:[%s1 + $0x78] sm:$0xff]
        %v352 = vld [vmem:[%s1 + $0x80] sm:$0xff]
        %v353 = vld [vmem:[%s1 + $0x88] sm:$0xff]
        %v354 = vld [vmem:[%s1 + $0x90] sm:$0xff]
        %v355 = vld [vmem:[%s1 + $0x98] sm:$0xff]
        %v356 = vld [vmem:[%s1 + $0xa0] sm:$0xff]
        %v357 = vld [vmem:[%s1 + $0xa8] sm:$0xff]
        %v358 = vld [vmem:[%s1 + $0xb0] sm:$0xff]
        %v359 = vld [vmem:[%s1 + $0xb8] sm:$0xff]
        %v360 = vld [vmem:[%s1 + $0xc0] sm:$0xff]
        %v361 = vld [vmem:[%s1 + $0xc8] sm:$0xff]
        %v362 = vld [vmem:[%s1 + $0xd0] sm:$0xff]
        %v363 = vld [vmem:[%s1 + $0xd8] sm:$0xff]
        %v364 = vld [vmem:[%s1 + $0xe0] sm:$0xff]
        %v365 = vld [vmem:[%s1 + $0xe8] sm:$0xff]
        %v366 = vld [vmem:[%s1 + $0xf0] sm:$0xff]
        %v367 = vld [vmem:[%s1 + $0xf8] sm:$0xff]
        %v368 = vld [vmem:[%s1 + $0x100] sm:$0xff]
        %v369 = vld [vmem:[%s1 + $0x108] sm:$0xff]
        %v370 = vld [vmem:[%s1 + $0x110] sm:$0xff]
        %v371 = vld [vmem:[%s1 + $0x118] sm:$0xff]
        %v372 = vld [vmem:[%s1 + $0x120] sm:$0xff]
        %v373 = vld [vmem:[%s1 + $0x128] sm:$0xff]
        %v374 = vld [vmem:[%s1 + $0x130] sm:$0xff]
        %v375 = vld [vmem:[%s1 + $0x138] sm:$0xff]
        %v376 = vld [vmem:[%s1 + $0x140] sm:$0xff]
        %v377 = vld [vmem:[%s1 + $0x148] sm:$0xff]
        %v378 = vld [vmem:[%s1 + $0x150] sm:$0xff]
        %v379 = vld [vmem:[%s1 + $0x158] sm:$0xff]
        %v380 = vld [vmem:[%s1 + $0x160] sm:$0xff]
        %v381 = vld [vmem:[%s1 + $0x168] sm:$0xff]
        %v382 = vld [vmem:[%s1 + $0x170] sm:$0xff]
        %v383 = vld [vmem:[%s1 + $0x178] sm:$0xff]
        %v384 = vld [vmem:[%s1 + $0x180] sm:$0xff]
        %v385 = vld [vmem:[%s1 + $0x188] sm:$0xff]
        %v386 = vld [vmem:[%s1 + $0x190] sm:$0xff]
        %v387 = vld [vmem:[%s1 + $0x198] sm:$0xff]
        %v388 = vld [vmem:[%s1 + $0x1a0] sm:$0xff]
        %v389 = vld [vmem:[%s1 + $0x1a8] sm:$0xff]
        %v390 = vld [vmem:[%s1 + $0x1b0] sm:$0xff]
        %v391 = vld [vmem:[%s1 + $0x1b8] sm:$0xff]
        %v392 = vld [vmem:[%s1 + $0x1c0] sm:$0xff]
        %v393 = vld [vmem:[%s1 + $0x1c8] sm:$0xff]
        %v394 = vld [vmem:[%s1 + $0x1d0] sm:$0xff]
        %v395 = vld [vmem:[%s1 + $0x1d8] sm:$0xff]
        %v396 = vld [vmem:[%s1 + $0x1e0] sm:$0xff]
        %v397 = vld [vmem:[%s1 + $0x1e8] sm:$0xff]
        %v398 = vld [vmem:[%s1 + $0x1f0] sm:$0xff]
        %v399 = vld [vmem:[%s1 + $0x1f8] sm:$0xff]
        %v400 = vld [vmem:[%s1 + $0x200] sm:$0xff]
        %v401 = vld [vmem:[%s1 + $0x208] sm:$0xff]
        %v402 = vld [vmem:[%s1 + $0x210] sm:$0xff]
        %v403 = vld [vmem:[%s1 + $0x218] sm:$0xff]
        %v404 = vld [vmem:[%s1 + $0x220] sm:$0xff]
        %v405 = vld [vmem:[%s1 + $0x228] sm:$0xff]
        %v406 = vld [vmem:[%s1 + $0x230] sm:$0xff]
        %v407 = vld [vmem:[%s1 + $0x238] sm:$0xff]
        %v408 = vld [vmem:[%s1 + $0x240] sm:$0xff]
        %v409 = vld [vmem:[%s1 + $0x248] sm:$0xff]
        %v410 = vld [vmem:[%s1 + $0x250] sm:$0xff]
        %v411 = vld [vmem:[%s1 + $0x258] sm:$0xff]
        %v412 = vld [vmem:[%s1 + $0x260] sm:$0xff]
        %v413 = vld [vmem:[%s1 + $0x268] sm:$0xff]
        %v414 = vld [vmem:[%s1 + $0x270] sm:$0xff]
        %v415 = vld [vmem:[%s1 + $0x278] sm:$0xff]
        %v416 = vld [vmem:[%s1 + $0x280] sm:$0xff]
        %v417 = vld [vmem:[%s1 + $0x288] sm:$0xff]
        %v418 = vld [vmem:[%s1 + $0x290] sm:$0xff]
        %v419 = vld [vmem:[%s1 + $0x298] sm:$0xff]
        %v420 = vld [vmem:[%s1 + $0x2a0] sm:$0xff]
        %v421 = vld [vmem:[%s1 + $0x2a8] sm:$0xff]
        %v422 = vld [vmem:[%s1 + $0x2b0] sm:$0xff]
        %v423 = vld [vmem:[%s1 + $0x2b8] sm:$0xff]
        %v424 = vld [vmem:[%s1 + $0x2c0] sm:$0xff]
        %v425 = vld [vmem:[%s1 + $0x2c8] sm:$0xff]
        %v426 = vld [vmem:[%s1 + $0x2d0] sm:$0xff]
        %v427 = vld [vmem:[%s1 + $0x2d8] sm:$0xff]
        %v428 = vld [vmem:[%s1 + $0x2e0] sm:$0xff]
        %v429 = vld [vmem:[%s1 + $0x2e8] sm:$0xff]
        %v430 = vld [vmem:[%s1 + $0x2f0] sm:$0xff]
        %v431 = vld [vmem:[%s1 + $0x2f8] sm:$0xff]
        %v432 = vld [vmem:[%s1 + $0x300] sm:$0xff]
        %v433 = vld [vmem:[%s1 + $0x308] sm:$0xff]
        %v434 = vld [vmem:[%s1 + $0x310] sm:$0xff]
        %v435 = vld [vmem:[%s1 + $0x318] sm:$0xff]
        %v436 = vld [vmem:[%s1 + $0x320] sm:$0xff]
        %v437 = vld [vmem:[%s1 + $0x328] sm:$0xff]
        %v438 = vld [vmem:[%s1 + $0x330] sm:$0xff]
        %v439 = vld [vmem:[%s1 + $0x338] sm:$0xff]
        %v440 = vld [vmem:[%s1 + $0x340] sm:$0xff]
        %v441 = vld [vmem:[%s1 + $0x348] sm:$0xff]
        %v442 = vld [vmem:[%s1 + $0x350] sm:$0xff]
        %v443 = vld [vmem:[%s1 + $0x358] sm:$0xff]
        %v444 = vld [vmem:[%s1 + $0x360] sm:$0xff]
        %v445 = vld [vmem:[%s1 + $0x368] sm:$0xff]
        %v446 = vld [vmem:[%s1 + $0x370] sm:$0xff]
        %v447 = vld [vmem:[%s1 + $0x378] sm:$0xff]
        %v448 = vld [vmem:[%s1 + $0x380] sm:$0xff]
        %v449 = vld [vmem:[%s1 + $0x388] sm:$0xff]
        %v450 = vld [vmem:[%s1 + $0x390] sm:$0xff]
        %v451 = vld [vmem:[%s1 + $0x398] sm:$0xff]
        %v452 = vld [vmem:[%s1 + $0x3a0] sm:$0xff]
        %v453 = vld [vmem:[%s1 + $0x3a8] sm:$0xff]
        %v454 = vld [vmem:[%s1 + $0x3b0] sm:$0xff]
        %v455 = vld [vmem:[%s1 + $0x3b8] sm:$0xff]
        %v456 = vld [vmem:[%s1 + $0x3c0] sm:$0xff]
        %v457 = vld [vmem:[%s1 + $0x3c8] sm:$0xff]
        %v458 = vld [vmem:[%s1 + $0x3d0] sm:$0xff]
        %v459 = vld [vmem:[%s1 + $0x3d8] sm:$0xff]
        %v460 = vld [vmem:[%s1 + $0x3e0] sm:$0xff]
        %v461 = vld [vmem:[%s1 + $0x3e8] sm:$0xff]
        %v462 = vld [vmem:[%s1 + $0x3f0] sm:$0xff]
        %v463 = vld [vmem:[%s1 + $0x3f8] sm:$0xff]
        %v464 = vld [vmem:[%s1 + $0x400] sm:$0xff]
        %v465 = vld [vmem:[%s1 + $0x408] sm:$0xff]
        %v466 = vld [vmem:[%s1 + $0x410] sm:$0xff]
        %v467 = vld [vmem:[%s1 + $0x418] sm:$0xff]
        %v468 = vld [vmem:[%s1 + $0x420] sm:$0xff]
        %v469 = vld [vmem:[%s1 + $0x428] sm:$0xff]
        %v470 = vld [vmem:[%s1 + $0x430] sm:$0xff]
        %v471 = vld [vmem:[%s1 + $0x438] sm:$0xff]
        %v472 = vld [vmem:[%s1 + $0x440] sm:$0xff]
        %v473 = vld [vmem:[%s1 + $0x448] sm:$0xff]
        %v474 = vld [vmem:[%s1 + $0x450] sm:$0xff]
        %v475 = vld [vmem:[%s1 + $0x458] sm:$0xff]
        %v476 = vld [vmem:[%s1 + $0x460] sm:$0xff]
        %v477 = vld [vmem:[%s1 + $0x468] sm:$0xff]
        %v478 = vld [vmem:[%s1 + $0x470] sm:$0xff]
        %v479 = vld [vmem:[%s1 + $0x478] sm:$0xff]
        %v480 = vld [vmem:[%s1 + $0x480] sm:$0xff]
        %v481 = vld [vmem:[%s1 + $0x488] sm:$0xff]
        %v482 = vld [vmem:[%s1 + $0x490] sm:$0xff]
        %v483 = vld [vmem:[%s1 + $0x498] sm:$0xff]
        %v484 = vld [vmem:[%s1 + $0x4a0] sm:$0xff]
        %v485 = vld [vmem:[%s1 + $0x4a8] sm:$0xff]
        %v486 = vld [vmem:[%s1 + $0x4b0] sm:$0xff]
        %v487 = vld [vmem:[%s1 + $0x4b8] sm:$0xff]
        %v488 = vld [vmem:[%s1 + $0x4c0] sm:$0xff]
        %v489 = vld [vmem:[%s1 + $0x4c8] sm:$0xff]
        %v490 = vld [vmem:[%s1 + $0x4d0] sm:$0xff]
        %v491 = vld [vmem:[%s1 + $0x4d8] sm:$0xff]
        %v492 = vld [vmem:[%s1 + $0x4e0] sm:$0xff]
        %v493 = vld [vmem:[%s1 + $0x4e8] sm:$0xff]
        %v494 = vld [vmem:[%s1 + $0x4f0] sm:$0xff]
        %v495 = vld [vmem:[%s1 + $0x4f8] sm:$0xff]
        %v496 = vld [vmem:[%s1 + $0x500] sm:$0xff]
        %v497 = vld [vmem:[%s1 + $0x508] sm:$0xff]
        %v498 = vld [vmem:[%s1 + $0x510] sm:$0xff]
        %v499 = vld [vmem:[%s1 + $0x518] sm:$0xff]
        %v500 = vld [vmem:[%s1 + $0x520] sm:$0xff]
        %v501 = vld [vmem:[%s1 + $0x528] sm:$0xff]
        %v502 = vld [vmem:[%s1 + $0x530] sm:$0xff]
        %v503 = vld [vmem:[%s1 + $0x538] sm:$0xff]
        %v504 = vld [vmem:[%s1 + $0x540] sm:$0xff]
        %v505 = vld [vmem:[%s1 + $0x548] sm:$0xff]
        %v506 = vld [vmem:[%s1 + $0x550] sm:$0xff]
        %v507 = vld [vmem:[%s1 + $0x558] sm:$0xff]
        %v508 = vld [vmem:[%s1 + $0x560] sm:$0xff]
        %v509 = vld [vmem:[%s1 + $0x568] sm:$0xff]
        %v510 = vld [vmem:[%s1 + $0x570] sm:$0xff]
        %v511 = vld [vmem:[%s1 + $0x578] sm:$0xff]
        %v512 = vld [vmem:[%s1 + $0x580] sm:$0xff]
        %v513 = vld [vmem:[%s1 + $0x588] sm:$0xff]
        %v514 = vld [vmem:[%s1 + $0x590] sm:$0xff]
        %v515 = vld [vmem:[%s1 + $0x598] sm:$0xff]
        %v516 = vld [vmem:[%s1 + $0x5a0] sm:$0xff]
        %v517 = vld [vmem:[%s1 + $0x5a8] sm:$0xff]
        %v518 = vld [vmem:[%s1 + $0x5b0] sm:$0xff]
        %v519 = vld [vmem:[%s1 + $0x5b8] sm:$0xff]
        %v520 = vld [vmem:[%s1 + $0x5c0] sm:$0xff]
        %v521 = vld [vmem:[%s1 + $0x5c8] sm:$0xff]
        %v522 = vld [vmem:[%s1 + $0x5d0] sm:$0xff]
        %v523 = vld [vmem:[%s1 + $0x5d8] sm:$0xff]
        %v524 = vld [vmem:[%s1 + $0x5e0] sm:$0xff]
        %v525 = vld [vmem:[%s1 + $0x5e8] sm:$0xff]
        %v526 = vld [vmem:[%s1 + $0x5f0] sm:$0xff]
        %v527 = vld [vmem:[%s1 + $0x5f8] sm:$0xff]
        %v528 = vld [vmem:[%s1 + $0x600] sm:$0xff]
        %v529 = vld [vmem:[%s1 + $0x608] sm:$0xff]
        %v530 = vld [vmem:[%s1 + $0x610] sm:$0xff]
        %v531 = vld [vmem:[%s1 + $0x618] sm:$0xff]
        %v532 = vld [vmem:[%s1 + $0x620] sm:$0xff]
        %v533 = vld [vmem:[%s1 + $0x628] sm:$0xff]
        %v534 = vld [vmem:[%s1 + $0x630] sm:$0xff]
        %v535 = vld [vmem:[%s1 + $0x638] sm:$0xff]
        %v536 = vld [vmem:[%s1 + $0x640] sm:$0xff]
        %v537 = vld [vmem:[%s1 + $0x648] sm:$0xff]
        %v538 = vld [vmem:[%s1 + $0x650] sm:$0xff]
        %v539 = vld [vmem:[%s1 + $0x658] sm:$0xff]
        %v540 = vld [vmem:[%s1 + $0x660] sm:$0xff]
        %v541 = vld [vmem:[%s1 + $0x668] sm:$0xff]
        %v542 = vld [vmem:[%s1 + $0x670] sm:$0xff]
        %v543 = vld [vmem:[%s1 + $0x678] sm:$0xff]
        %v544 = vld [vmem:[%s1 + $0x680] sm:$0xff]
        %v545 = vld [vmem:[%s1 + $0x688] sm:$0xff]
        %v546 = vld [vmem:[%s1 + $0x690] sm:$0xff]
        %v547 = vld [vmem:[%s1 + $0x698] sm:$0xff]
        %v548 = vld [vmem:[%s1 + $0x6a0] sm:$0xff]
        %v549 = vld [vmem:[%s1 + $0x6a8] sm:$0xff]
        %v550 = vld [vmem:[%s1 + $0x6b0] sm:$0xff]
        %v551 = vld [vmem:[%s1 + $0x6b8] sm:$0xff]
        %v552 = vld [vmem:[%s1 + $0x6c0] sm:$0xff]
        %v553 = vld [vmem:[%s1 + $0x6c8] sm:$0xff]
        %v554 = vld [vmem:[%s1 + $0x6d0] sm:$0xff]
        %v555 = vld [vmem:[%s1 + $0x6d8] sm:$0xff]
        %v556 = vld [vmem:[%s1 + $0x6e0] sm:$0xff]
        %v557 = vld [vmem:[%s1 + $0x6e8] sm:$0xff]
        %v558 = vld [vmem:[%s1 + $0x6f0] sm:$0xff]
        %v559 = vld [vmem:[%s1 + $0x6f8] sm:$0xff]
        %v560 = vld [vmem:[%s2] sm:$0xf]
        %v562 = vlaneseq
        %v563 = vshrl.u32 %v562, 7
        %v564 = vsub.s32 0, %v563
        %v565 = vrot.slane %v560, %v564
        %v566 = vlaneseq
        %v567 = vshrl.u32 %v566, 7
        %v568 = vsub.s32 1, %v567
        %v569 = vrot.slane %v560, %v568
        %v570 = vlaneseq
        %v571 = vshrl.u32 %v570, 7
        %v572 = vsub.s32 2, %v571
        %v573 = vrot.slane %v560, %v572
        %v574 = vlaneseq
        %v575 = vshrl.u32 %v574, 7
        %v576 = vsub.s32 3, %v575
        %v577 = vrot.slane %v560, %v576
        %v586 = vunpack.c.l.b16 %v332
        %v587 = vunpack.c.h.b16 %v332
        %v588 = vunpack.c.l.b16 %v333
        %v589 = vunpack.c.h.b16 %v333
        %v590 = vunpack.c.l.b16 %v334
        %v591 = vunpack.c.h.b16 %v334
        %v592 = vunpack.c.l.b16 %v335
        %v593 = vpack.c.b16 %v586, %v586
        %v594 = vpack.c.b16 %v587, %v587
        %v595 = vpack.c.b16 %v588, %v588
        %v596 = vpack.c.b16 %v589, %v589
        %v597 = vpack.c.b16 %v590, %v590
        %v598 = vpack.c.b16 %v591, %v591
        %v599 = vpack.c.b16 %v592, %v592
        %v831 = vunpack.c.l.b16 %v336
        %v832 = vunpack.c.h.b16 %v336
        %v833 = vunpack.c.l.b16 %v337
        %v834 = vunpack.c.h.b16 %v337
        %v835 = vunpack.c.l.b16 %v338
        %v836 = vunpack.c.h.b16 %v338
        %v837 = vunpack.c.l.b16 %v339
        %v838 = vunpack.c.h.b16 %v339
        %v839 = vunpack.c.l.b16 %v340
        %v840 = vunpack.c.h.b16 %v340
        %v841 = vunpack.c.l.b16 %v341
        %v842 = vunpack.c.h.b16 %v341
        %v843 = vunpack.c.l.b16 %v342
        %v844 = vunpack.c.h.b16 %v342
        %v845 = vunpack.c.l.b16 %v343
        %v846 = vunpack.c.h.b16 %v343
        %v847 = vunpack.c.l.b16 %v344
        %v848 = vunpack.c.h.b16 %v344
        %v849 = vunpack.c.l.b16 %v345
        %v850 = vunpack.c.h.b16 %v345
        %v851 = vunpack.c.l.b16 %v346
        %v852 = vunpack.c.h.b16 %v346
        %v853 = vunpack.c.l.b16 %v347
        %v854 = vunpack.c.h.b16 %v347
        %v855 = vunpack.c.l.b16 %v348
        %v856 = vunpack.c.h.b16 %v348
        %v857 = vunpack.c.l.b16 %v349
        %v858 = vunpack.c.h.b16 %v349
        %v859 = vunpack.c.l.b16 %v350
        %v860 = vunpack.c.h.b16 %v350
        %v861 = vunpack.c.l.b16 %v351
        %v862 = vunpack.c.h.b16 %v351
        %v863 = vunpack.c.l.b16 %v352
        %v864 = vunpack.c.h.b16 %v352
        %v865 = vunpack.c.l.b16 %v353
        %v866 = vunpack.c.h.b16 %v353
        %v867 = vunpack.c.l.b16 %v354
        %v868 = vunpack.c.h.b16 %v354
        %v869 = vunpack.c.l.b16 %v355
        %v870 = vunpack.c.h.b16 %v355
        %v871 = vunpack.c.l.b16 %v356
        %v872 = vunpack.c.h.b16 %v356
        %v873 = vunpack.c.l.b16 %v357
        %v874 = vunpack.c.h.b16 %v357
        %v875 = vunpack.c.l.b16 %v358
        %v876 = vunpack.c.h.b16 %v358
        %v877 = vunpack.c.l.b16 %v359
        %v878 = vunpack.c.h.b16 %v359
        %v879 = vunpack.c.l.b16 %v360
        %v880 = vunpack.c.h.b16 %v360
        %v881 = vunpack.c.l.b16 %v361
        %v882 = vunpack.c.h.b16 %v361
        %v883 = vunpack.c.l.b16 %v362
        %v884 = vunpack.c.h.b16 %v362
        %v885 = vunpack.c.l.b16 %v363
        %v886 = vunpack.c.h.b16 %v363
        %v887 = vunpack.c.l.b16 %v364
        %v888 = vunpack.c.h.b16 %v364
        %v889 = vunpack.c.l.b16 %v365
        %v890 = vunpack.c.h.b16 %v365
        %v891 = vunpack.c.l.b16 %v366
        %v892 = vunpack.c.h.b16 %v366
        %v893 = vunpack.c.l.b16 %v367
        %v894 = vunpack.c.h.b16 %v367
        %v895 = vunpack.c.l.b16 %v368
        %v896 = vunpack.c.h.b16 %v368
        %v897 = vunpack.c.l.b16 %v369
        %v898 = vunpack.c.h.b16 %v369
        %v899 = vunpack.c.l.b16 %v370
        %v900 = vunpack.c.h.b16 %v370
        %v901 = vunpack.c.l.b16 %v371
        %v902 = vunpack.c.h.b16 %v371
        %v903 = vunpack.c.l.b16 %v372
        %v904 = vunpack.c.h.b16 %v372
        %v905 = vunpack.c.l.b16 %v373
        %v906 = vunpack.c.h.b16 %v373
        %v907 = vunpack.c.l.b16 %v374
        %v908 = vunpack.c.h.b16 %v374
        %v909 = vunpack.c.l.b16 %v375
        %v910 = vunpack.c.h.b16 %v375
        %v911 = vunpack.c.l.b16 %v376
        %v912 = vunpack.c.h.b16 %v376
        %v913 = vunpack.c.l.b16 %v377
        %v914 = vunpack.c.h.b16 %v377
        %v915 = vunpack.c.l.b16 %v378
        %v916 = vunpack.c.h.b16 %v378
        %v917 = vunpack.c.l.b16 %v379
        %v918 = vunpack.c.h.b16 %v379
        %v919 = vunpack.c.l.b16 %v380
        %v920 = vunpack.c.h.b16 %v380
        %v921 = vunpack.c.l.b16 %v381
        %v922 = vunpack.c.h.b16 %v381
        %v923 = vunpack.c.l.b16 %v382
        %v924 = vunpack.c.h.b16 %v382
        %v925 = vunpack.c.l.b16 %v383
        %v926 = vunpack.c.h.b16 %v383
        %v927 = vunpack.c.l.b16 %v384
        %v928 = vunpack.c.h.b16 %v384
        %v929 = vunpack.c.l.b16 %v385
        %v930 = vunpack.c.h.b16 %v385
        %v931 = vunpack.c.l.b16 %v386
        %v932 = vunpack.c.h.b16 %v386
        %v933 = vunpack.c.l.b16 %v387
        %v934 = vunpack.c.h.b16 %v387
        %v935 = vunpack.c.l.b16 %v388
        %v936 = vunpack.c.h.b16 %v388
        %v937 = vunpack.c.l.b16 %v389
        %v938 = vunpack.c.h.b16 %v389
        %v939 = vunpack.c.l.b16 %v390
        %v940 = vunpack.c.h.b16 %v390
        %v941 = vunpack.c.l.b16 %v391
        %v942 = vunpack.c.h.b16 %v391
        %v943 = vunpack.c.l.b16 %v392
        %v944 = vunpack.c.h.b16 %v392
        %v945 = vunpack.c.l.b16 %v393
        %v946 = vunpack.c.h.b16 %v393
        %v947 = vunpack.c.l.b16 %v394
        %v948 = vunpack.c.h.b16 %v394
        %v949 = vunpack.c.l.b16 %v395
        %v950 = vunpack.c.h.b16 %v395
        %v951 = vunpack.c.l.b16 %v396
        %v952 = vunpack.c.h.b16 %v396
        %v953 = vunpack.c.l.b16 %v397
        %v954 = vunpack.c.h.b16 %v397
        %v955 = vunpack.c.l.b16 %v398
        %v956 = vunpack.c.h.b16 %v398
        %v957 = vunpack.c.l.b16 %v399
        %v958 = vunpack.c.h.b16 %v399
        %v959 = vunpack.c.l.b16 %v400
        %v960 = vunpack.c.h.b16 %v400
        %v961 = vunpack.c.l.b16 %v401
        %v962 = vunpack.c.h.b16 %v401
        %v963 = vunpack.c.l.b16 %v402
        %v964 = vunpack.c.h.b16 %v402
        %v965 = vunpack.c.l.b16 %v403
        %v966 = vunpack.c.h.b16 %v403
        %v967 = vunpack.c.l.b16 %v404
        %v968 = vunpack.c.h.b16 %v404
        %v969 = vunpack.c.l.b16 %v405
        %v970 = vunpack.c.h.b16 %v405
        %v971 = vunpack.c.l.b16 %v406
        %v972 = vunpack.c.h.b16 %v406
        %v973 = vunpack.c.l.b16 %v407
        %v974 = vunpack.c.h.b16 %v407
        %v975 = vunpack.c.l.b16 %v408
        %v976 = vunpack.c.h.b16 %v408
        %v977 = vunpack.c.l.b16 %v409
        %v978 = vunpack.c.h.b16 %v409
        %v979 = vunpack.c.l.b16 %v410
        %v980 = vunpack.c.h.b16 %v410
        %v981 = vunpack.c.l.b16 %v411
        %v982 = vunpack.c.h.b16 %v411
        %v983 = vunpack.c.l.b16 %v412
        %v984 = vunpack.c.h.b16 %v412
        %v985 = vunpack.c.l.b16 %v413
        %v986 = vunpack.c.h.b16 %v413
        %v987 = vunpack.c.l.b16 %v414
        %v988 = vunpack.c.h.b16 %v414
        %v989 = vunpack.c.l.b16 %v415
        %v990 = vunpack.c.h.b16 %v415
        %v991 = vunpack.c.l.b16 %v416
        %v992 = vunpack.c.h.b16 %v416
        %v993 = vunpack.c.l.b16 %v417
        %v994 = vunpack.c.h.b16 %v417
        %v995 = vunpack.c.l.b16 %v418
        %v996 = vunpack.c.h.b16 %v418
        %v997 = vunpack.c.l.b16 %v419
        %v998 = vunpack.c.h.b16 %v419
        %v999 = vunpack.c.l.b16 %v420
        %v1000 = vunpack.c.h.b16 %v420
        %v1001 = vunpack.c.l.b16 %v421
        %v1002 = vunpack.c.h.b16 %v421
        %v1003 = vunpack.c.l.b16 %v422
        %v1004 = vunpack.c.h.b16 %v422
        %v1005 = vunpack.c.l.b16 %v423
        %v1006 = vunpack.c.h.b16 %v423
        %v1007 = vunpack.c.l.b16 %v424
        %v1008 = vunpack.c.h.b16 %v424
        %v1009 = vunpack.c.l.b16 %v425
        %v1010 = vunpack.c.h.b16 %v425
        %v1011 = vunpack.c.l.b16 %v426
        %v1012 = vunpack.c.h.b16 %v426
        %v1013 = vunpack.c.l.b16 %v427
        %v1014 = vunpack.c.h.b16 %v427
        %v1015 = vunpack.c.l.b16 %v428
        %v1016 = vunpack.c.h.b16 %v428
        %v1017 = vunpack.c.l.b16 %v429
        %v1018 = vunpack.c.h.b16 %v429
        %v1019 = vunpack.c.l.b16 %v430
        %v1020 = vunpack.c.h.b16 %v430
        %v1021 = vunpack.c.l.b16 %v431
        %v1022 = vunpack.c.h.b16 %v431
        %v1023 = vunpack.c.l.b16 %v432
        %v1024 = vunpack.c.h.b16 %v432
        %v1025 = vunpack.c.l.b16 %v433
        %v1026 = vunpack.c.h.b16 %v433
        %v1027 = vunpack.c.l.b16 %v434
        %v1028 = vunpack.c.h.b16 %v434
        %v1029 = vunpack.c.l.b16 %v435
        %v1030 = vunpack.c.h.b16 %v435
        %v1031 = vunpack.c.l.b16 %v436
        %v1032 = vunpack.c.h.b16 %v436
        %v1033 = vunpack.c.l.b16 %v437
        %v1034 = vunpack.c.h.b16 %v437
        %v1035 = vunpack.c.l.b16 %v438
        %v1036 = vunpack.c.h.b16 %v438
        %v1037 = vunpack.c.l.b16 %v439
        %v1038 = vunpack.c.h.b16 %v439
        %v1039 = vunpack.c.l.b16 %v440
        %v1040 = vunpack.c.h.b16 %v440
        %v1041 = vunpack.c.l.b16 %v441
        %v1042 = vunpack.c.h.b16 %v441
        %v1043 = vunpack.c.l.b16 %v442
        %v1044 = vunpack.c.h.b16 %v442
        %v1045 = vunpack.c.l.b16 %v443
        %v1046 = vunpack.c.h.b16 %v443
        %v1047 = vunpack.c.l.b16 %v444
        %v1048 = vunpack.c.h.b16 %v444
        %v1049 = vunpack.c.l.b16 %v445
        %v1050 = vunpack.c.h.b16 %v445
        %v1051 = vunpack.c.l.b16 %v446
        %v1052 = vunpack.c.h.b16 %v446
        %v1053 = vunpack.c.l.b16 %v447
        %v1054 = vunpack.c.h.b16 %v447
        %v1055 = vunpack.c.l.b16 %v448
        %v1056 = vunpack.c.h.b16 %v448
        %v1057 = vunpack.c.l.b16 %v449
        %v1058 = vunpack.c.h.b16 %v449
        %v1059 = vunpack.c.l.b16 %v450
        %v1060 = vunpack.c.h.b16 %v450
        %v1061 = vunpack.c.l.b16 %v451
        %v1062 = vunpack.c.h.b16 %v451
        %v1063 = vunpack.c.l.b16 %v452
        %v1064 = vunpack.c.h.b16 %v452
        %v1065 = vunpack.c.l.b16 %v453
        %v1066 = vunpack.c.h.b16 %v453
        %v1067 = vunpack.c.l.b16 %v454
        %v1068 = vunpack.c.h.b16 %v454
        %v1069 = vunpack.c.l.b16 %v455
        %v1070 = vunpack.c.h.b16 %v455
        %v1071 = vunpack.c.l.b16 %v456
        %v1072 = vunpack.c.h.b16 %v456
        %v1073 = vunpack.c.l.b16 %v457
        %v1074 = vunpack.c.h.b16 %v457
        %v1075 = vunpack.c.l.b16 %v458
        %v1076 = vunpack.c.h.b16 %v458
        %v1077 = vunpack.c.l.b16 %v459
        %v1078 = vunpack.c.h.b16 %v459
        %v1079 = vunpack.c.l.b16 %v460
        %v1080 = vunpack.c.h.b16 %v460
        %v1081 = vunpack.c.l.b16 %v461
        %v1082 = vunpack.c.h.b16 %v461
        %v1083 = vunpack.c.l.b16 %v462
        %v1084 = vunpack.c.h.b16 %v462
        %v1085 = vunpack.c.l.b16 %v463
        %v1086 = vunpack.c.h.b16 %v463
        %v1087 = vunpack.c.l.b16 %v464
        %v1088 = vunpack.c.h.b16 %v464
        %v1089 = vunpack.c.l.b16 %v465
        %v1090 = vunpack.c.h.b16 %v465
        %v1091 = vunpack.c.l.b16 %v466
        %v1092 = vunpack.c.h.b16 %v466
        %v1093 = vunpack.c.l.b16 %v467
        %v1094 = vunpack.c.h.b16 %v467
        %v1095 = vunpack.c.l.b16 %v468
        %v1096 = vunpack.c.h.b16 %v468
        %v1097 = vunpack.c.l.b16 %v469
        %v1098 = vunpack.c.h.b16 %v469
        %v1099 = vunpack.c.l.b16 %v470
        %v1100 = vunpack.c.h.b16 %v470
        %v1101 = vunpack.c.l.b16 %v471
        %v1102 = vunpack.c.h.b16 %v471
        %v1103 = vunpack.c.l.b16 %v472
        %v1104 = vunpack.c.h.b16 %v472
        %v1105 = vunpack.c.l.b16 %v473
        %v1106 = vunpack.c.h.b16 %v473
        %v1107 = vunpack.c.l.b16 %v474
        %v1108 = vunpack.c.h.b16 %v474
        %v1109 = vunpack.c.l.b16 %v475
        %v1110 = vunpack.c.h.b16 %v475
        %v1111 = vunpack.c.l.b16 %v476
        %v1112 = vunpack.c.h.b16 %v476
        %v1113 = vunpack.c.l.b16 %v477
        %v1114 = vunpack.c.h.b16 %v477
        %v1115 = vunpack.c.l.b16 %v478
        %v1116 = vunpack.c.h.b16 %v478
        %v1117 = vunpack.c.l.b16 %v479
        %v1118 = vunpack.c.h.b16 %v479
        %v1119 = vunpack.c.l.b16 %v480
        %v1120 = vunpack.c.h.b16 %v480
        %v1121 = vunpack.c.l.b16 %v481
        %v1122 = vunpack.c.h.b16 %v481
        %v1123 = vunpack.c.l.b16 %v482
        %v1124 = vunpack.c.h.b16 %v482
        %v1125 = vunpack.c.l.b16 %v483
        %v1126 = vunpack.c.h.b16 %v483
        %v1127 = vunpack.c.l.b16 %v484
        %v1128 = vunpack.c.h.b16 %v484
        %v1129 = vunpack.c.l.b16 %v485
        %v1130 = vunpack.c.h.b16 %v485
        %v1131 = vunpack.c.l.b16 %v486
        %v1132 = vunpack.c.h.b16 %v486
        %v1133 = vunpack.c.l.b16 %v487
        %v1134 = vunpack.c.h.b16 %v487
        %v1135 = vunpack.c.l.b16 %v488
        %v1136 = vunpack.c.h.b16 %v488
        %v1137 = vunpack.c.l.b16 %v489
        %v1138 = vunpack.c.h.b16 %v489
        %v1139 = vunpack.c.l.b16 %v490
        %v1140 = vunpack.c.h.b16 %v490
        %v1141 = vunpack.c.l.b16 %v491
        %v1142 = vunpack.c.h.b16 %v491
        %v1143 = vunpack.c.l.b16 %v492
        %v1144 = vunpack.c.h.b16 %v492
        %v1145 = vunpack.c.l.b16 %v493
        %v1146 = vunpack.c.h.b16 %v493
        %v1147 = vunpack.c.l.b16 %v494
        %v1148 = vunpack.c.h.b16 %v494
        %v1149 = vunpack.c.l.b16 %v495
        %v1150 = vunpack.c.h.b16 %v495
        %v1151 = vunpack.c.l.b16 %v496
        %v1152 = vunpack.c.h.b16 %v496
        %v1153 = vunpack.c.l.b16 %v497
        %v1154 = vunpack.c.h.b16 %v497
        %v1155 = vunpack.c.l.b16 %v498
        %v1156 = vunpack.c.h.b16 %v498
        %v1157 = vunpack.c.l.b16 %v499
        %v1158 = vunpack.c.h.b16 %v499
        %v1159 = vunpack.c.l.b16 %v500
        %v1160 = vunpack.c.h.b16 %v500
        %v1161 = vunpack.c.l.b16 %v501
        %v1162 = vunpack.c.h.b16 %v501
        %v1163 = vunpack.c.l.b16 %v502
        %v1164 = vunpack.c.h.b16 %v502
        %v1165 = vunpack.c.l.b16 %v503
        %v1166 = vunpack.c.h.b16 %v503
        %v1167 = vunpack.c.l.b16 %v504
        %v1168 = vunpack.c.h.b16 %v504
        %v1169 = vunpack.c.l.b16 %v505
        %v1170 = vunpack.c.h.b16 %v505
        %v1171 = vunpack.c.l.b16 %v506
        %v1172 = vunpack.c.h.b16 %v506
        %v1173 = vunpack.c.l.b16 %v507
        %v1174 = vunpack.c.h.b16 %v507
        %v1175 = vunpack.c.l.b16 %v508
        %v1176 = vunpack.c.h.b16 %v508
        %v1177 = vunpack.c.l.b16 %v509
        %v1178 = vunpack.c.h.b16 %v509
        %v1179 = vunpack.c.l.b16 %v510
        %v1180 = vunpack.c.h.b16 %v510
        %v1181 = vunpack.c.l.b16 %v511
        %v1182 = vunpack.c.h.b16 %v511
        %v1183 = vunpack.c.l.b16 %v512
        %v1184 = vunpack.c.h.b16 %v512
        %v1185 = vunpack.c.l.b16 %v513
        %v1186 = vunpack.c.h.b16 %v513
        %v1187 = vunpack.c.l.b16 %v514
        %v1188 = vunpack.c.h.b16 %v514
        %v1189 = vunpack.c.l.b16 %v515
        %v1190 = vunpack.c.h.b16 %v515
        %v1191 = vunpack.c.l.b16 %v516
        %v1192 = vunpack.c.h.b16 %v516
        %v1193 = vunpack.c.l.b16 %v517
        %v1194 = vunpack.c.h.b16 %v517
        %v1195 = vunpack.c.l.b16 %v518
        %v1196 = vunpack.c.h.b16 %v518
        %v1197 = vunpack.c.l.b16 %v519
        %v1198 = vunpack.c.h.b16 %v519
        %v1199 = vunpack.c.l.b16 %v520
        %v1200 = vunpack.c.h.b16 %v520
        %v1201 = vunpack.c.l.b16 %v521
        %v1202 = vunpack.c.h.b16 %v521
        %v1203 = vunpack.c.l.b16 %v522
        %v1204 = vunpack.c.h.b16 %v522
        %v1205 = vunpack.c.l.b16 %v523
        %v1206 = vunpack.c.h.b16 %v523
        %v1207 = vunpack.c.l.b16 %v524
        %v1208 = vunpack.c.h.b16 %v524
        %v1209 = vunpack.c.l.b16 %v525
        %v1210 = vunpack.c.h.b16 %v525
        %v1211 = vunpack.c.l.b16 %v526
        %v1212 = vunpack.c.h.b16 %v526
        %v1213 = vunpack.c.l.b16 %v527
        %v1214 = vunpack.c.h.b16 %v527
        %v1215 = vunpack.c.l.b16 %v528
        %v1216 = vunpack.c.h.b16 %v528
        %v1217 = vunpack.c.l.b16 %v529
        %v1218 = vunpack.c.h.b16 %v529
        %v1219 = vunpack.c.l.b16 %v530
        %v1220 = vunpack.c.h.b16 %v530
        %v1221 = vunpack.c.l.b16 %v531
        %v1222 = vunpack.c.h.b16 %v531
        %v1223 = vunpack.c.l.b16 %v532
        %v1224 = vunpack.c.h.b16 %v532
        %v1225 = vunpack.c.l.b16 %v533
        %v1226 = vunpack.c.h.b16 %v533
        %v1227 = vunpack.c.l.b16 %v534
        %v1228 = vunpack.c.h.b16 %v534
        %v1229 = vunpack.c.l.b16 %v535
        %v1230 = vunpack.c.h.b16 %v535
        %v1231 = vunpack.c.l.b16 %v536
        %v1232 = vunpack.c.h.b16 %v536
        %v1233 = vunpack.c.l.b16 %v537
        %v1234 = vunpack.c.h.b16 %v537
        %v1235 = vunpack.c.l.b16 %v538
        %v1236 = vunpack.c.h.b16 %v538
        %v1237 = vunpack.c.l.b16 %v539
        %v1238 = vunpack.c.h.b16 %v539
        %v1239 = vunpack.c.l.b16 %v540
        %v1240 = vunpack.c.h.b16 %v540
        %v1241 = vunpack.c.l.b16 %v541
        %v1242 = vunpack.c.h.b16 %v541
        %v1243 = vunpack.c.l.b16 %v542
        %v1244 = vunpack.c.h.b16 %v542
        %v1245 = vunpack.c.l.b16 %v543
        %v1246 = vunpack.c.h.b16 %v543
        %v1247 = vunpack.c.l.b16 %v544
        %v1248 = vunpack.c.h.b16 %v544
        %v1249 = vunpack.c.l.b16 %v545
        %v1250 = vunpack.c.h.b16 %v545
        %v1251 = vunpack.c.l.b16 %v546
        %v1252 = vunpack.c.h.b16 %v546
        %v1253 = vunpack.c.l.b16 %v547
        %v1254 = vunpack.c.h.b16 %v547
        %v1255 = vunpack.c.l.b16 %v548
        %v1256 = vunpack.c.h.b16 %v548
        %v1257 = vunpack.c.l.b16 %v549
        %v1258 = vunpack.c.h.b16 %v549
        %v1259 = vunpack.c.l.b16 %v550
        %v1260 = vunpack.c.h.b16 %v550
        %v1261 = vunpack.c.l.b16 %v551
        %v1262 = vunpack.c.h.b16 %v551
        %v1263 = vunpack.c.l.b16 %v552
        %v1264 = vunpack.c.h.b16 %v552
        %v1265 = vunpack.c.l.b16 %v553
        %v1266 = vunpack.c.h.b16 %v553
        %v1267 = vunpack.c.l.b16 %v554
        %v1268 = vunpack.c.h.b16 %v554
        %v1269 = vunpack.c.l.b16 %v555
        %v1270 = vunpack.c.h.b16 %v555
        %v1271 = vunpack.c.l.b16 %v556
        %v1272 = vunpack.c.h.b16 %v556
        %v1273 = vunpack.c.l.b16 %v557
        %v1274 = vunpack.c.h.b16 %v557
        %v1275 = vunpack.c.l.b16 %v558
        %v1276 = vunpack.c.h.b16 %v558
        %v1277 = vunpack.c.l.b16 %v559
        %v1278 = vunpack.c.h.b16 %v559
        %v1279 = vpack.c.b16 %v835, %v831
        %v1280 = vpack.c.b16 %v836, %v832
        %v1281 = vpack.c.b16 %v837, %v833
        %v1282 = vpack.c.b16 %v838, %v834
        %v1283 = vpack.c.b16 %v843, %v839
        %v1284 = vpack.c.b16 %v844, %v840
        %v1285 = vpack.c.b16 %v845, %v841
        %v1286 = vpack.c.b16 %v846, %v842
        %v1287 = vpack.c.b16 %v851, %v847
        %v1288 = vpack.c.b16 %v852, %v848
        %v1289 = vpack.c.b16 %v853, %v849
        %v1290 = vpack.c.b16 %v854, %v850
        %v1291 = vpack.c.b16 %v859, %v855
        %v1292 = vpack.c.b16 %v860, %v856
        %v1293 = vpack.c.b16 %v861, %v857
        %v1294 = vpack.c.b16 %v862, %v858
        %v1295 = vpack.c.b16 %v867, %v863
        %v1296 = vpack.c.b16 %v868, %v864
        %v1297 = vpack.c.b16 %v869, %v865
        %v1298 = vpack.c.b16 %v870, %v866
        %v1299 = vpack.c.b16 %v875, %v871
        %v1300 = vpack.c.b16 %v876, %v872
        %v1301 = vpack.c.b16 %v877, %v873
        %v1302 = vpack.c.b16 %v878, %v874
        %v1303 = vpack.c.b16 %v883, %v879
        %v1304 = vpack.c.b16 %v884, %v880
        %v1305 = vpack.c.b16 %v885, %v881
        %v1306 = vpack.c.b16 %v886, %v882
        %v1307 = vpack.c.b16 %v891, %v887
        %v1308 = vpack.c.b16 %v892, %v888
        %v1309 = vpack.c.b16 %v893, %v889
        %v1310 = vpack.c.b16 %v894, %v890
        %v1311 = vpack.c.b16 %v899, %v895
        %v1312 = vpack.c.b16 %v900, %v896
        %v1313 = vpack.c.b16 %v901, %v897
        %v1314 = vpack.c.b16 %v902, %v898
        %v1315 = vpack.c.b16 %v907, %v903
        %v1316 = vpack.c.b16 %v908, %v904
        %v1317 = vpack.c.b16 %v909, %v905
        %v1318 = vpack.c.b16 %v910, %v906
        %v1319 = vpack.c.b16 %v915, %v911
        %v1320 = vpack.c.b16 %v916, %v912
        %v1321 = vpack.c.b16 %v917, %v913
        %v1322 = vpack.c.b16 %v918, %v914
        %v1323 = vpack.c.b16 %v923, %v919
        %v1324 = vpack.c.b16 %v924, %v920
        %v1325 = vpack.c.b16 %v925, %v921
        %v1326 = vpack.c.b16 %v926, %v922
        %v1327 = vpack.c.b16 %v931, %v927
        %v1328 = vpack.c.b16 %v932, %v928
        %v1329 = vpack.c.b16 %v933, %v929
        %v1330 = vpack.c.b16 %v934, %v930
        %v1331 = vpack.c.b16 %v939, %v935
        %v1332 = vpack.c.b16 %v940, %v936
        %v1333 = vpack.c.b16 %v941, %v937
        %v1334 = vpack.c.b16 %v942, %v938
        %v1335 = vpack.c.b16 %v947, %v943
        %v1336 = vpack.c.b16 %v948, %v944
        %v1337 = vpack.c.b16 %v949, %v945
        %v1338 = vpack.c.b16 %v950, %v946
        %v1339 = vpack.c.b16 %v955, %v951
        %v1340 = vpack.c.b16 %v956, %v952
        %v1341 = vpack.c.b16 %v957, %v953
        %v1342 = vpack.c.b16 %v958, %v954
        %v1343 = vpack.c.b16 %v963, %v959
        %v1344 = vpack.c.b16 %v964, %v960
        %v1345 = vpack.c.b16 %v965, %v961
        %v1346 = vpack.c.b16 %v966, %v962
        %v1347 = vpack.c.b16 %v971, %v967
        %v1348 = vpack.c.b16 %v972, %v968
        %v1349 = vpack.c.b16 %v973, %v969
        %v1350 = vpack.c.b16 %v974, %v970
        %v1351 = vpack.c.b16 %v979, %v975
        %v1352 = vpack.c.b16 %v980, %v976
        %v1353 = vpack.c.b16 %v981, %v977
        %v1354 = vpack.c.b16 %v982, %v978
        %v1355 = vpack.c.b16 %v987, %v983
        %v1356 = vpack.c.b16 %v988, %v984
        %v1357 = vpack.c.b16 %v989, %v985
        %v1358 = vpack.c.b16 %v990, %v986
        %v1359 = vpack.c.b16 %v995, %v991
        %v1360 = vpack.c.b16 %v996, %v992
        %v1361 = vpack.c.b16 %v997, %v993
        %v1362 = vpack.c.b16 %v998, %v994
        %v1363 = vpack.c.b16 %v1003, %v999
        %v1364 = vpack.c.b16 %v1004, %v1000
        %v1365 = vpack.c.b16 %v1005, %v1001
        %v1366 = vpack.c.b16 %v1006, %v1002
        %v1367 = vpack.c.b16 %v1011, %v1007
        %v1368 = vpack.c.b16 %v1012, %v1008
        %v1369 = vpack.c.b16 %v1013, %v1009
        %v1370 = vpack.c.b16 %v1014, %v1010
        %v1371 = vpack.c.b16 %v1019, %v1015
        %v1372 = vpack.c.b16 %v1020, %v1016
        %v1373 = vpack.c.b16 %v1021, %v1017
        %v1374 = vpack.c.b16 %v1022, %v1018
        %v1375 = vpack.c.b16 %v1027, %v1023
        %v1376 = vpack.c.b16 %v1028, %v1024
        %v1377 = vpack.c.b16 %v1029, %v1025
        %v1378 = vpack.c.b16 %v1030, %v1026
        %v1379 = vpack.c.b16 %v1035, %v1031
        %v1380 = vpack.c.b16 %v1036, %v1032
        %v1381 = vpack.c.b16 %v1037, %v1033
        %v1382 = vpack.c.b16 %v1038, %v1034
        %v1383 = vpack.c.b16 %v1043, %v1039
        %v1384 = vpack.c.b16 %v1044, %v1040
        %v1385 = vpack.c.b16 %v1045, %v1041
        %v1386 = vpack.c.b16 %v1046, %v1042
        %v1387 = vpack.c.b16 %v1051, %v1047
        %v1388 = vpack.c.b16 %v1052, %v1048
        %v1389 = vpack.c.b16 %v1053, %v1049
        %v1390 = vpack.c.b16 %v1054, %v1050
        %v1391 = vpack.c.b16 %v1059, %v1055
        %v1392 = vpack.c.b16 %v1060, %v1056
        %v1393 = vpack.c.b16 %v1061, %v1057
        %v1394 = vpack.c.b16 %v1062, %v1058
        %v1395 = vpack.c.b16 %v1067, %v1063
        %v1396 = vpack.c.b16 %v1068, %v1064
        %v1397 = vpack.c.b16 %v1069, %v1065
        %v1398 = vpack.c.b16 %v1070, %v1066
        %v1399 = vpack.c.b16 %v1075, %v1071
        %v1400 = vpack.c.b16 %v1076, %v1072
        %v1401 = vpack.c.b16 %v1077, %v1073
        %v1402 = vpack.c.b16 %v1078, %v1074
        %v1403 = vpack.c.b16 %v1083, %v1079
        %v1404 = vpack.c.b16 %v1084, %v1080
        %v1405 = vpack.c.b16 %v1085, %v1081
        %v1406 = vpack.c.b16 %v1086, %v1082
        %v1407 = vpack.c.b16 %v1091, %v1087
        %v1408 = vpack.c.b16 %v1092, %v1088
        %v1409 = vpack.c.b16 %v1093, %v1089
        %v1410 = vpack.c.b16 %v1094, %v1090
        %v1411 = vpack.c.b16 %v1099, %v1095
        %v1412 = vpack.c.b16 %v1100, %v1096
        %v1413 = vpack.c.b16 %v1101, %v1097
        %v1414 = vpack.c.b16 %v1102, %v1098
        %v1415 = vpack.c.b16 %v1107, %v1103
        %v1416 = vpack.c.b16 %v1108, %v1104
        %v1417 = vpack.c.b16 %v1109, %v1105
        %v1418 = vpack.c.b16 %v1110, %v1106
        %v1419 = vpack.c.b16 %v1115, %v1111
        %v1420 = vpack.c.b16 %v1116, %v1112
        %v1421 = vpack.c.b16 %v1117, %v1113
        %v1422 = vpack.c.b16 %v1118, %v1114
        %v1423 = vpack.c.b16 %v1123, %v1119
        %v1424 = vpack.c.b16 %v1124, %v1120
        %v1425 = vpack.c.b16 %v1125, %v1121
        %v1426 = vpack.c.b16 %v1126, %v1122
        %v1427 = vpack.c.b16 %v1131, %v1127
        %v1428 = vpack.c.b16 %v1132, %v1128
        %v1429 = vpack.c.b16 %v1133, %v1129
        %v1430 = vpack.c.b16 %v1134, %v1130
        %v1431 = vpack.c.b16 %v1139, %v1135
        %v1432 = vpack.c.b16 %v1140, %v1136
        %v1433 = vpack.c.b16 %v1141, %v1137
        %v1434 = vpack.c.b16 %v1142, %v1138
        %v1435 = vpack.c.b16 %v1147, %v1143
        %v1436 = vpack.c.b16 %v1148, %v1144
        %v1437 = vpack.c.b16 %v1149, %v1145
        %v1438 = vpack.c.b16 %v1150, %v1146
        %v1439 = vpack.c.b16 %v1155, %v1151
        %v1440 = vpack.c.b16 %v1156, %v1152
        %v1441 = vpack.c.b16 %v1157, %v1153
        %v1442 = vpack.c.b16 %v1158, %v1154
        %v1443 = vpack.c.b16 %v1163, %v1159
        %v1444 = vpack.c.b16 %v1164, %v1160
        %v1445 = vpack.c.b16 %v1165, %v1161
        %v1446 = vpack.c.b16 %v1166, %v1162
        %v1447 = vpack.c.b16 %v1171, %v1167
        %v1448 = vpack.c.b16 %v1172, %v1168
        %v1449 = vpack.c.b16 %v1173, %v1169
        %v1450 = vpack.c.b16 %v1174, %v1170
        %v1451 = vpack.c.b16 %v1179, %v1175
        %v1452 = vpack.c.b16 %v1180, %v1176
        %v1453 = vpack.c.b16 %v1181, %v1177
        %v1454 = vpack.c.b16 %v1182, %v1178
        %v1455 = vpack.c.b16 %v1187, %v1183
        %v1456 = vpack.c.b16 %v1188, %v1184
        %v1457 = vpack.c.b16 %v1189, %v1185
        %v1458 = vpack.c.b16 %v1190, %v1186
        %v1459 = vpack.c.b16 %v1195, %v1191
        %v1460 = vpack.c.b16 %v1196, %v1192
        %v1461 = vpack.c.b16 %v1197, %v1193
        %v1462 = vpack.c.b16 %v1198, %v1194
        %v1463 = vpack.c.b16 %v1203, %v1199
        %v1464 = vpack.c.b16 %v1204, %v1200
        %v1465 = vpack.c.b16 %v1205, %v1201
        %v1466 = vpack.c.b16 %v1206, %v1202
        %v1467 = vpack.c.b16 %v1211, %v1207
        %v1468 = vpack.c.b16 %v1212, %v1208
        %v1469 = vpack.c.b16 %v1213, %v1209
        %v1470 = vpack.c.b16 %v1214, %v1210
        %v1471 = vpack.c.b16 %v1219, %v1215
        %v1472 = vpack.c.b16 %v1220, %v1216
        %v1473 = vpack.c.b16 %v1221, %v1217
        %v1474 = vpack.c.b16 %v1222, %v1218
        %v1475 = vpack.c.b16 %v1227, %v1223
        %v1476 = vpack.c.b16 %v1228, %v1224
        %v1477 = vpack.c.b16 %v1229, %v1225
        %v1478 = vpack.c.b16 %v1230, %v1226
        %v1479 = vpack.c.b16 %v1235, %v1231
        %v1480 = vpack.c.b16 %v1236, %v1232
        %v1481 = vpack.c.b16 %v1237, %v1233
        %v1482 = vpack.c.b16 %v1238, %v1234
        %v1483 = vpack.c.b16 %v1243, %v1239
        %v1484 = vpack.c.b16 %v1244, %v1240
        %v1485 = vpack.c.b16 %v1245, %v1241
        %v1486 = vpack.c.b16 %v1246, %v1242
        %v1487 = vpack.c.b16 %v1251, %v1247
        %v1488 = vpack.c.b16 %v1252, %v1248
        %v1489 = vpack.c.b16 %v1253, %v1249
        %v1490 = vpack.c.b16 %v1254, %v1250
        %v1491 = vpack.c.b16 %v1259, %v1255
        %v1492 = vpack.c.b16 %v1260, %v1256
        %v1493 = vpack.c.b16 %v1261, %v1257
        %v1494 = vpack.c.b16 %v1262, %v1258
        %v1495 = vpack.c.b16 %v1267, %v1263
        %v1496 = vpack.c.b16 %v1268, %v1264
        %v1497 = vpack.c.b16 %v1269, %v1265
        %v1498 = vpack.c.b16 %v1270, %v1266
        %v1499 = vpack.c.b16 %v1275, %v1271
        %v1500 = vpack.c.b16 %v1276, %v1272
        %v1501 = vpack.c.b16 %v1277, %v1273
        %v1502 = vpack.c.b16 %v1278, %v1274
        %1727 = vmatprep.subr.bf16.mxu0 %v1280
        %1728 = vmatpush1.bf16.msra.mxu0 %v1279
        %1729 = vmatprep.subr.bf16.mxu0 %v1284
        %1730 = vmatpush1.bf16.msra.mxu0 %v1283
        %1731 = vmatprep.subr.bf16.mxu0 %v1288
        %1732 = vmatpush1.bf16.msra.mxu0 %v1287
        %1733 = vmatprep.subr.bf16.mxu0 %v1292
        %1734 = vmatpush1.bf16.msra.mxu0 %v1291
        %1735 = vmatprep.subr.bf16.mxu0 %v1296
        %1736 = vmatpush1.bf16.msra.mxu0 %v1295
        %1737 = vmatprep.subr.bf16.mxu0 %v1300
        %1738 = vmatpush1.bf16.msra.mxu0 %v1299
        %1739 = vmatprep.subr.bf16.mxu0 %v1304
        %1740 = vmatpush1.bf16.msra.mxu0 %v1303
        %1741 = vmatprep.subr.bf16.mxu0 %v1308
        %1742 = vmatpush1.bf16.msra.mxu0 %v1307
        %1743 = vmatprep.subr.bf16.mxu0 %v1312
        %1744 = vmatpush1.bf16.msra.mxu0 %v1311
        %1745 = vmatprep.subr.bf16.mxu0 %v1316
        %1746 = vmatpush1.bf16.msra.mxu0 %v1315
        %1747 = vmatprep.subr.bf16.mxu0 %v1320
        %1748 = vmatpush1.bf16.msra.mxu0 %v1319
        %1749 = vmatprep.subr.bf16.mxu0 %v1324
        %1750 = vmatpush1.bf16.msra.mxu0 %v1323
        %1751 = vmatprep.subr.bf16.mxu0 %v1328
        %1752 = vmatpush1.bf16.msra.mxu0 %v1327
        %1753 = vmatprep.subr.bf16.mxu0 %v1332
        %1754 = vmatpush1.bf16.msra.mxu0 %v1331
        %1755 = vmatprep.subr.bf16.mxu0 %v1336
        %1756 = vmatpush1.bf16.msra.mxu0 %v1335
        %1757 = vmatprep.subr.bf16.mxu0 %v1340
        %1758 = vmatpush1.bf16.msra.mxu0 %v1339
        %1759 = vmatprep.mubr.bf16.mxu0 %v594
        %1760 = vmatmul.mubr.bf16.gmra.mrb[0].mxu0 %v593
        %v1761 = vpop.f32.mrb[0].mxu0
        %v1762 = vadd.f32 %v565, %v1761
        %v1763 = vpop.f32.mrb[0].mxu0
        %v1764 = vadd.f32 %v569, %v1763
        %v1765 = vpop.f32.mrb[0].mxu0
        %v1766 = vpop.f32.mrb[0].mxu0
        %1767 = vdwg.mxu0
        %1768 = vmatprep.subr.bf16.mxu0 %v1344
        %1769 = vmatpush1.bf16.msra.mxu0 %v1343
        %1770 = vmatprep.subr.bf16.mxu0 %v1348
        %1771 = vmatpush1.bf16.msra.mxu0 %v1347
        %1772 = vmatprep.subr.bf16.mxu0 %v1352
        %1773 = vmatpush1.bf16.msra.mxu0 %v1351
        %1774 = vmatprep.subr.bf16.mxu0 %v1356
        %1775 = vmatpush1.bf16.msra.mxu0 %v1355
        %1776 = vmatprep.subr.bf16.mxu0 %v1360
        %1777 = vmatpush1.bf16.msra.mxu0 %v1359
        %1778 = vmatprep.subr.bf16.mxu0 %v1364
        %1779 = vmatpush1.bf16.msra.mxu0 %v1363
        %1780 = vmatprep.subr.bf16.mxu0 %v1368
        %1781 = vmatpush1.bf16.msra.mxu0 %v1367
        %1782 = vmatprep.subr.bf16.mxu0 %v1372
        %1783 = vmatpush1.bf16.msra.mxu0 %v1371
        %1784 = vmatprep.subr.bf16.mxu0 %v1376
        %1785 = vmatpush1.bf16.msra.mxu0 %v1375
        %1786 = vmatprep.subr.bf16.mxu0 %v1380
        %1787 = vmatpush1.bf16.msra.mxu0 %v1379
        %1788 = vmatprep.subr.bf16.mxu0 %v1384
        %1789 = vmatpush1.bf16.msra.mxu0 %v1383
        %1790 = vmatprep.subr.bf16.mxu0 %v1388
        %1791 = vmatpush1.bf16.msra.mxu0 %v1387
        %1792 = vmatprep.subr.bf16.mxu0 %v1392
        %1793 = vmatpush1.bf16.msra.mxu0 %v1391
        %1794 = vmatprep.subr.bf16.mxu0 %v1396
        %1795 = vmatpush1.bf16.msra.mxu0 %v1395
        %1796 = vmatprep.subr.bf16.mxu0 %v1400
        %1797 = vmatpush1.bf16.msra.mxu0 %v1399
        %1798 = vmatprep.subr.bf16.mxu0 %v1404
        %1799 = vmatpush1.bf16.msra.mxu0 %v1403
        %1800 = vmatprep.mubr.bf16.mxu0 %v596
        %1801 = vmatmul.mubr.bf16.gmra.mrb[0].mxu0 %v595
        %v1802 = vpop.f32.mrb[0].mxu0
        %v1803 = vadd.f32 %v1762, %v1802
        %v1804 = vpop.f32.mrb[0].mxu0
        %v1805 = vadd.f32 %v1764, %v1804
        %v1806 = vpop.f32.mrb[0].mxu0
        %v1807 = vpop.f32.mrb[0].mxu0
        %1808 = vdwg.mxu0
        %1809 = vmatprep.subr.bf16.mxu0 %v1408
        %1810 = vmatpush1.bf16.msra.mxu0 %v1407
        %1811 = vmatprep.subr.bf16.mxu0 %v1412
        %1812 = vmatpush1.bf16.msra.mxu0 %v1411
        %1813 = vmatprep.subr.bf16.mxu0 %v1416
        %1814 = vmatpush1.bf16.msra.mxu0 %v1415
        %1815 = vmatprep.subr.bf16.mxu0 %v1420
        %1816 = vmatpush1.bf16.msra.mxu0 %v1419
        %1817 = vmatprep.subr.bf16.mxu0 %v1424
        %1818 = vmatpush1.bf16.msra.mxu0 %v1423
        %1819 = vmatprep.subr.bf16.mxu0 %v1428
        %1820 = vmatpush1.bf16.msra.mxu0 %v1427
        %1821 = vmatprep.subr.bf16.mxu0 %v1432
        %1822 = vmatpush1.bf16.msra.mxu0 %v1431
        %1823 = vmatprep.subr.bf16.mxu0 %v1436
        %1824 = vmatpush1.bf16.msra.mxu0 %v1435
        %1825 = vmatprep.subr.bf16.mxu0 %v1440
        %1826 = vmatpush1.bf16.msra.mxu0 %v1439
        %1827 = vmatprep.subr.bf16.mxu0 %v1444
        %1828 = vmatpush1.bf16.msra.mxu0 %v1443
        %1829 = vmatprep.subr.bf16.mxu0 %v1448
        %1830 = vmatpush1.bf16.msra.mxu0 %v1447
        %1831 = vmatprep.subr.bf16.mxu0 %v1452
        %1832 = vmatpush1.bf16.msra.mxu0 %v1451
        %1833 = vmatprep.subr.bf16.mxu0 %v1456
        %1834 = vmatpush1.bf16.msra.mxu0 %v1455
        %1835 = vmatprep.subr.bf16.mxu0 %v1460
        %1836 = vmatpush1.bf16.msra.mxu0 %v1459
        %1837 = vmatprep.subr.bf16.mxu0 %v1464
        %1838 = vmatpush1.bf16.msra.mxu0 %v1463
        %1839 = vmatprep.subr.bf16.mxu0 %v1468
        %1840 = vmatpush1.bf16.msra.mxu0 %v1467
        %1841 = vmatprep.mubr.bf16.mxu0 %v598
        %1842 = vmatmul.mubr.bf16.gmra.mrb[0].mxu0 %v597
        %v1843 = vpop.f32.mrb[0].mxu0
        %v1844 = vadd.f32 %v1803, %v1843
        %v1845 = vpop.f32.mrb[0].mxu0
        %v1846 = vadd.f32 %v1805, %v1845
        %v1847 = vpop.f32.mrb[0].mxu0
        %v1848 = vpop.f32.mrb[0].mxu0
        %1849 = vdwg.mxu0
        %1850 = vmatprep.subr.bf16.mxu0 %v1472
        %1851 = vmatpush1.bf16.msra.mxu0 %v1471
        %1852 = vmatprep.subr.bf16.mxu0 %v1476
        %1853 = vmatpush1.bf16.msra.mxu0 %v1475
        %1854 = vmatprep.subr.bf16.mxu0 %v1480
        %1855 = vmatpush1.bf16.msra.mxu0 %v1479
        %1856 = vmatprep.subr.bf16.mxu0 %v1484
        %1857 = vmatpush1.bf16.msra.mxu0 %v1483
        %1858 = vmatprep.subr.bf16.mxu0 %v1488
        %1859 = vmatpush1.bf16.msra.mxu0 %v1487
        %1860 = vmatprep.subr.bf16.mxu0 %v1492
        %1861 = vmatpush1.bf16.msra.mxu0 %v1491
        %1862 = vmatprep.subr.bf16.mxu0 %v1496
        %1863 = vmatpush1.bf16.msra.mxu0 %v1495
        %1864 = vmatprep.subr.bf16.mxu0 %v1500
        %1865 = vmatpush1.bf16.msra.mxu0 %v1499
        %1866 = vmatprep.subr.bf16.mxu0 0
        %1867 = vmatpush1.bf16.msra.mxu0 0
        %1868 = vmatprep.subr.bf16.mxu0 0
        %1869 = vmatpush1.bf16.msra.mxu0 0
        %1870 = vmatprep.subr.bf16.mxu0 0
        %1871 = vmatpush1.bf16.msra.mxu0 0
        %1872 = vmatprep.subr.bf16.mxu0 0
        %1873 = vmatpush1.bf16.msra.mxu0 0
        %1874 = vmatprep.subr.bf16.mxu0 0
        %1875 = vmatpush1.bf16.msra.mxu0 0
        %1876 = vmatprep.subr.bf16.mxu0 0
        %1877 = vmatpush1.bf16.msra.mxu0 0
        %1878 = vmatprep.subr.bf16.mxu0 0
        %1879 = vmatpush1.bf16.msra.mxu0 0
        %1880 = vmatprep.subr.bf16.mxu0 0
        %1881 = vmatpush1.bf16.msra.mxu0 0
        %1882 = vmatprep.mubr.bf16.mxu0 0
        %1883 = vmatmul.mubr.bf16.gmra.mrb[0].mxu0 %v599
        %v1884 = vpop.f32.mrb[0].mxu0
        %v1885 = vadd.f32 %v1844, %v1884
        %v1886 = vpop.f32.mrb[0].mxu0
        %v1887 = vadd.f32 %v1846, %v1886
        %v1888 = vpop.f32.mrb[0].mxu0
        %v1889 = vpop.f32.mrb[0].mxu0
        %1890 = vdwg.mxu0
        %1891 = vmatprep.subr.bf16.mxu0 %v1282
        %1892 = vmatpush1.bf16.msra.mxu0 %v1281
        %1893 = vmatprep.subr.bf16.mxu0 %v1286
        %1894 = vmatpush1.bf16.msra.mxu0 %v1285
        %1895 = vmatprep.subr.bf16.mxu0 %v1290
        %1896 = vmatpush1.bf16.msra.mxu0 %v1289
        %1897 = vmatprep.subr.bf16.mxu0 %v1294
        %1898 = vmatpush1.bf16.msra.mxu0 %v1293
        %1899 = vmatprep.subr.bf16.mxu0 %v1298
        %1900 = vmatpush1.bf16.msra.mxu0 %v1297
        %1901 = vmatprep.subr.bf16.mxu0 %v1302
        %1902 = vmatpush1.bf16.msra.mxu0 %v1301
        %1903 = vmatprep.subr.bf16.mxu0 %v1306
        %1904 = vmatpush1.bf16.msra.mxu0 %v1305
        %1905 = vmatprep.subr.bf16.mxu0 %v1310
        %1906 = vmatpush1.bf16.msra.mxu0 %v1309
        %1907 = vmatprep.subr.bf16.mxu0 %v1314
        %1908 = vmatpush1.bf16.msra.mxu0 %v1313
        %1909 = vmatprep.subr.bf16.mxu0 %v1318
        %1910 = vmatpush1.bf16.msra.mxu0 %v1317
        %1911 = vmatprep.subr.bf16.mxu0 %v1322
        %1912 = vmatpush1.bf16.msra.mxu0 %v1321
        %1913 = vmatprep.subr.bf16.mxu0 %v1326
        %1914 = vmatpush1.bf16.msra.mxu0 %v1325
        %1915 = vmatprep.subr.bf16.mxu0 %v1330
        %1916 = vmatpush1.bf16.msra.mxu0 %v1329
        %1917 = vmatprep.subr.bf16.mxu0 %v1334
        %1918 = vmatpush1.bf16.msra.mxu0 %v1333
        %1919 = vmatprep.subr.bf16.mxu0 %v1338
        %1920 = vmatpush1.bf16.msra.mxu0 %v1337
        %1921 = vmatprep.subr.bf16.mxu0 %v1342
        %1922 = vmatpush1.bf16.msra.mxu0 %v1341
        %1923 = vmatprep.mubr.bf16.mxu0 %v594
        %1924 = vmatmul.mubr.bf16.gmra.mrb[0].mxu0 %v593
        %v1925 = vpop.f32.mrb[0].mxu0
        %v1926 = vadd.f32 %v573, %v1925
        %v1927 = vpop.f32.mrb[0].mxu0
        %v1928 = vadd.f32 %v577, %v1927
        %v1929 = vpop.f32.mrb[0].mxu0
        %v1930 = vpop.f32.mrb[0].mxu0
        %1931 = vdwg.mxu0
        %1932 = vmatprep.subr.bf16.mxu0 %v1346
        %1933 = vmatpush1.bf16.msra.mxu0 %v1345
        %1934 = vmatprep.subr.bf16.mxu0 %v1350
        %1935 = vmatpush1.bf16.msra.mxu0 %v1349
        %1936 = vmatprep.subr.bf16.mxu0 %v1354
        %1937 = vmatpush1.bf16.msra.mxu0 %v1353
        %1938 = vmatprep.subr.bf16.mxu0 %v1358
        %1939 = vmatpush1.bf16.msra.mxu0 %v1357
        %1940 = vmatprep.subr.bf16.mxu0 %v1362
        %1941 = vmatpush1.bf16.msra.mxu0 %v1361
        %1942 = vmatprep.subr.bf16.mxu0 %v1366
        %1943 = vmatpush1.bf16.msra.mxu0 %v1365
        %1944 = vmatprep.subr.bf16.mxu0 %v1370
        %1945 = vmatpush1.bf16.msra.mxu0 %v1369
        %1946 = vmatprep.subr.bf16.mxu0 %v1374
        %1947 = vmatpush1.bf16.msra.mxu0 %v1373
        %1948 = vmatprep.subr.bf16.mxu0 %v1378
        %1949 = vmatpush1.bf16.msra.mxu0 %v1377
        %1950 = vmatprep.subr.bf16.mxu0 %v1382
        %1951 = vmatpush1.bf16.msra.mxu0 %v1381
        %1952 = vmatprep.subr.bf16.mxu0 %v1386
        %1953 = vmatpush1.bf16.msra.mxu0 %v1385
        %1954 = vmatprep.subr.bf16.mxu0 %v1390
        %1955 = vmatpush1.bf16.msra.mxu0 %v1389
        %1956 = vmatprep.subr.bf16.mxu0 %v1394
        %1957 = vmatpush1.bf16.msra.mxu0 %v1393
        %1958 = vmatprep.subr.bf16.mxu0 %v1398
        %1959 = vmatpush1.bf16.msra.mxu0 %v1397
        %1960 = vmatprep.subr.bf16.mxu0 %v1402
        %1961 = vmatpush1.bf16.msra.mxu0 %v1401
        %1962 = vmatprep.subr.bf16.mxu0 %v1406
        %1963 = vmatpush1.bf16.msra.mxu0 %v1405
        %1964 = vmatprep.mubr.bf16.mxu0 %v596
        %1965 = vmatmul.mubr.bf16.gmra.mrb[0].mxu0 %v595
        %v1966 = vpop.f32.mrb[0].mxu0
        %v1967 = vadd.f32 %v1926, %v1966
        %v1968 = vpop.f32.mrb[0].mxu0
        %v1969 = vadd.f32 %v1928, %v1968
        %v1970 = vpop.f32.mrb[0].mxu0
        %v1971 = vpop.f32.mrb[0].mxu0
        %1972 = vdwg.mxu0
        %1973 = vmatprep.subr.bf16.mxu0 %v1410
        %1974 = vmatpush1.bf16.msra.mxu0 %v1409
        %1975 = vmatprep.subr.bf16.mxu0 %v1414
        %1976 = vmatpush1.bf16.msra.mxu0 %v1413
        %1977 = vmatprep.subr.bf16.mxu0 %v1418
        %1978 = vmatpush1.bf16.msra.mxu0 %v1417
        %1979 = vmatprep.subr.bf16.mxu0 %v1422
        %1980 = vmatpush1.bf16.msra.mxu0 %v1421
        %1981 = vmatprep.subr.bf16.mxu0 %v1426
        %1982 = vmatpush1.bf16.msra.mxu0 %v1425
        %1983 = vmatprep.subr.bf16.mxu0 %v1430
        %1984 = vmatpush1.bf16.msra.mxu0 %v1429
        %1985 = vmatprep.subr.bf16.mxu0 %v1434
        %1986 = vmatpush1.bf16.msra.mxu0 %v1433
        %1987 = vmatprep.subr.bf16.mxu0 %v1438
        %1988 = vmatpush1.bf16.msra.mxu0 %v1437
        %1989 = vmatprep.subr.bf16.mxu0 %v1442
        %1990 = vmatpush1.bf16.msra.mxu0 %v1441
        %1991 = vmatprep.subr.bf16.mxu0 %v1446
        %1992 = vmatpush1.bf16.msra.mxu0 %v1445
        %1993 = vmatprep.subr.bf16.mxu0 %v1450
        %1994 = vmatpush1.bf16.msra.mxu0 %v1449
        %1995 = vmatprep.subr.bf16.mxu0 %v1454
        %1996 = vmatpush1.bf16.msra.mxu0 %v1453
        %1997 = vmatprep.subr.bf16.mxu0 %v1458
        %1998 = vmatpush1.bf16.msra.mxu0 %v1457
        %1999 = vmatprep.subr.bf16.mxu0 %v1462
        %2000 = vmatpush1.bf16.msra.mxu0 %v1461
        %2001 = vmatprep.subr.bf16.mxu0 %v1466
        %2002 = vmatpush1.bf16.msra.mxu0 %v1465
        %2003 = vmatprep.subr.bf16.mxu0 %v1470
        %2004 = vmatpush1.bf16.msra.mxu0 %v1469
        %2005 = vmatprep.mubr.bf16.mxu0 %v598
        %2006 = vmatmul.mubr.bf16.gmra.mrb[0].mxu0 %v597
        %v2007 = vpop.f32.mrb[0].mxu0
        %v2008 = vadd.f32 %v1967, %v2007
        %v2009 = vpop.f32.mrb[0].mxu0
        %v2010 = vadd.f32 %v1969, %v2009
        %v2011 = vpop.f32.mrb[0].mxu0
        %v2012 = vpop.f32.mrb[0].mxu0
        %2013 = vdwg.mxu0
        %2014 = vmatprep.subr.bf16.mxu0 %v1474
        %2015 = vmatpush1.bf16.msra.mxu0 %v1473
        %2016 = vmatprep.subr.bf16.mxu0 %v1478
        %2017 = vmatpush1.bf16.msra.mxu0 %v1477
        %2018 = vmatprep.subr.bf16.mxu0 %v1482
        %2019 = vmatpush1.bf16.msra.mxu0 %v1481
        %2020 = vmatprep.subr.bf16.mxu0 %v1486
        %2021 = vmatpush1.bf16.msra.mxu0 %v1485
        %2022 = vmatprep.subr.bf16.mxu0 %v1490
        %2023 = vmatpush1.bf16.msra.mxu0 %v1489
        %2024 = vmatprep.subr.bf16.mxu0 %v1494
        %2025 = vmatpush1.bf16.msra.mxu0 %v1493
        %2026 = vmatprep.subr.bf16.mxu0 %v1498
        %2027 = vmatpush1.bf16.msra.mxu0 %v1497
        %2028 = vmatprep.subr.bf16.mxu0 %v1502
        %2029 = vmatpush1.bf16.msra.mxu0 %v1501
        %2030 = vmatprep.subr.bf16.mxu0 0
        %2031 = vmatpush1.bf16.msra.mxu0 0
        %2032 = vmatprep.subr.bf16.mxu0 0
        %2033 = vmatpush1.bf16.msra.mxu0 0
        %2034 = vmatprep.subr.bf16.mxu0 0
        %2035 = vmatpush1.bf16.msra.mxu0 0
        %2036 = vmatprep.subr.bf16.mxu0 0
        %2037 = vmatpush1.bf16.msra.mxu0 0
        %2038 = vmatprep.subr.bf16.mxu0 0
        %2039 = vmatpush1.bf16.msra.mxu0 0
        %2040 = vmatprep.subr.bf16.mxu0 0
        %2041 = vmatpush1.bf16.msra.mxu0 0
        %2042 = vmatprep.subr.bf16.mxu0 0
        %2043 = vmatpush1.bf16.msra.mxu0 0
        %2044 = vmatprep.subr.bf16.mxu0 0
        %2045 = vmatpush1.bf16.msra.mxu0 0
        %2046 = vmatprep.mubr.bf16.mxu0 0
        %2047 = vmatmul.mubr.bf16.gmra.mrb[0].mxu0 %v599
        %v2048 = vpop.f32.mrb[0].mxu0
        %v2049 = vadd.f32 %v2008, %v2048
        %v2050 = vpop.f32.mrb[0].mxu0
        %v2051 = vadd.f32 %v2010, %v2050
        %v2052 = vpop.f32.mrb[0].mxu0
        %v2053 = vpop.f32.mrb[0].mxu0
        %2054 = vdwg.mxu0
        %v2055 = vmax.f32 %v1885, 0.0
        %v2056 = vmax.f32 %v1887, 0.0
        %v2057 = vmax.f32 %v2049, 0.0
        %v2058 = vmax.f32 %v2051, 0.0
        %v2059 = vpack.c.bf16 %v2055, %v2055
        %v2060 = vpack.c.bf16 %v2056, %v2056
        %v2061 = vpack.c.bf16 %v2057, %v2057
        %v2062 = vpack.c.bf16 %v2058, %v2058
        %v2063 = vld [vmem:[%s3] sm:$0xff]
        %v2064 = vld [vmem:[%s3 + $0x8] sm:$0xff]
        %v2065 = vld [vmem:[%s3 + $0x10] sm:$0xff]
        %v2066 = vld [vmem:[%s3 + $0x18] sm:$0xff]
        %v2067 = vld [vmem:[%s3 + $0x20] sm:$0xff]
        %v2068 = vld [vmem:[%s3 + $0x28] sm:$0xff]
        %v2069 = vld [vmem:[%s3 + $0x30] sm:$0xff]
        %v2070 = vld [vmem:[%s3 + $0x38] sm:$0xff]
        %v2071 = vld [vmem:[%s3 + $0x40] sm:$0xff]
        %v2072 = vld [vmem:[%s3 + $0x48] sm:$0xff]
        %v2073 = vld [vmem:[%s3 + $0x50] sm:$0xff]
        %v2074 = vld [vmem:[%s3 + $0x58] sm:$0xff]
        %v2075 = vld [vmem:[%s3 + $0x60] sm:$0xff]
        %v2076 = vld [vmem:[%s3 + $0x68] sm:$0xff]
        %v2077 = vld [vmem:[%s3 + $0x70] sm:$0xff]
        %v2078 = vld [vmem:[%s3 + $0x78] sm:$0xff]
        %v2079 = vld [vmem:[%s3 + $0x80] sm:$0xff]
        %v2080 = vld [vmem:[%s3 + $0x88] sm:$0xff]
        %v2081 = vld [vmem:[%s3 + $0x90] sm:$0xff]
        %v2082 = vld [vmem:[%s3 + $0x98] sm:$0xff]
        %v2083 = vld [vmem:[%s3 + $0xa0] sm:$0xff]
        %v2084 = vld [vmem:[%s3 + $0xa8] sm:$0xff]
        %v2085 = vld [vmem:[%s3 + $0xb0] sm:$0xff]
        %v2086 = vld [vmem:[%s3 + $0xb8] sm:$0xff]
        %v2087 = vld [vmem:[%s3 + $0xc0] sm:$0xff]
        %v2088 = vld [vmem:[%s3 + $0xc8] sm:$0xff]
        %v2089 = vld [vmem:[%s3 + $0xd0] sm:$0xff]
        %v2090 = vld [vmem:[%s3 + $0xd8] sm:$0xff]
        %v2091 = vld [vmem:[%s3 + $0xe0] sm:$0xff]
        %v2092 = vld [vmem:[%s3 + $0xe8] sm:$0xff]
        %v2093 = vld [vmem:[%s3 + $0xf0] sm:$0xff]
        %v2094 = vld [vmem:[%s3 + $0xf8] sm:$0xff]
        %v2095 = vld [vmem:[%s3 + $0x100] sm:$0xff]
        %v2096 = vld [vmem:[%s3 + $0x108] sm:$0xff]
        %v2097 = vld [vmem:[%s3 + $0x110] sm:$0xff]
        %v2098 = vld [vmem:[%s3 + $0x118] sm:$0xff]
        %v2099 = vld [vmem:[%s3 + $0x120] sm:$0xff]
        %v2100 = vld [vmem:[%s3 + $0x128] sm:$0xff]
        %v2101 = vld [vmem:[%s3 + $0x130] sm:$0xff]
        %v2102 = vld [vmem:[%s3 + $0x138] sm:$0xff]
        %v2103 = vld [vmem:[%s3 + $0x140] sm:$0xff]
        %v2104 = vld [vmem:[%s3 + $0x148] sm:$0xff]
        %v2105 = vld [vmem:[%s3 + $0x150] sm:$0xff]
        %v2106 = vld [vmem:[%s3 + $0x158] sm:$0xff]
        %v2107 = vld [vmem:[%s3 + $0x160] sm:$0xff]
        %v2108 = vld [vmem:[%s3 + $0x168] sm:$0xff]
        %v2109 = vld [vmem:[%s3 + $0x170] sm:$0xff]
        %v2110 = vld [vmem:[%s3 + $0x178] sm:$0xff]
        %v2111 = vld [vmem:[%s3 + $0x180] sm:$0xff]
        %v2112 = vld [vmem:[%s3 + $0x188] sm:$0xff]
        %v2113 = vld [vmem:[%s3 + $0x190] sm:$0xff]
        %v2114 = vld [vmem:[%s3 + $0x198] sm:$0xff]
        %v2115 = vld [vmem:[%s3 + $0x1a0] sm:$0xff]
        %v2116 = vld [vmem:[%s3 + $0x1a8] sm:$0xff]
        %v2117 = vld [vmem:[%s3 + $0x1b0] sm:$0xff]
        %v2118 = vld [vmem:[%s3 + $0x1b8] sm:$0xff]
        %v2119 = vld [vmem:[%s3 + $0x1c0] sm:$0xff]
        %v2120 = vld [vmem:[%s3 + $0x1c8] sm:$0xff]
        %v2121 = vld [vmem:[%s3 + $0x1d0] sm:$0xff]
        %v2122 = vld [vmem:[%s3 + $0x1d8] sm:$0xff]
        %v2123 = vld [vmem:[%s3 + $0x1e0] sm:$0xff]
        %v2124 = vld [vmem:[%s3 + $0x1e8] sm:$0xff]
        %v2125 = vld [vmem:[%s3 + $0x1f0] sm:$0xff]
        %v2126 = vld [vmem:[%s3 + $0x1f8] sm:$0xff]
        %v2127 = vld [vmem:[%s4] sm:$0x3]
        %v2129 = vlaneseq
        %v2130 = vshrl.u32 %v2129, 7
        %v2131 = vsub.s32 0, %v2130
        %v2132 = vrot.slane %v2127, %v2131
        %v2133 = vlaneseq
        %v2134 = vshrl.u32 %v2133, 7
        %v2135 = vsub.s32 1, %v2134
        %v2136 = vrot.slane %v2127, %v2135
        %v2203 = vunpack.c.l.b16 %v2063
        %v2204 = vunpack.c.h.b16 %v2063
        %v2205 = vunpack.c.l.b16 %v2064
        %v2206 = vunpack.c.h.b16 %v2064
        %v2207 = vunpack.c.l.b16 %v2065
        %v2208 = vunpack.c.h.b16 %v2065
        %v2209 = vunpack.c.l.b16 %v2066
        %v2210 = vunpack.c.h.b16 %v2066
        %v2211 = vunpack.c.l.b16 %v2067
        %v2212 = vunpack.c.h.b16 %v2067
        %v2213 = vunpack.c.l.b16 %v2068
        %v2214 = vunpack.c.h.b16 %v2068
        %v2215 = vunpack.c.l.b16 %v2069
        %v2216 = vunpack.c.h.b16 %v2069
        %v2217 = vunpack.c.l.b16 %v2070
        %v2218 = vunpack.c.h.b16 %v2070
        %v2219 = vunpack.c.l.b16 %v2071
        %v2220 = vunpack.c.h.b16 %v2071
        %v2221 = vunpack.c.l.b16 %v2072
        %v2222 = vunpack.c.h.b16 %v2072
        %v2223 = vunpack.c.l.b16 %v2073
        %v2224 = vunpack.c.h.b16 %v2073
        %v2225 = vunpack.c.l.b16 %v2074
        %v2226 = vunpack.c.h.b16 %v2074
        %v2227 = vunpack.c.l.b16 %v2075
        %v2228 = vunpack.c.h.b16 %v2075
        %v2229 = vunpack.c.l.b16 %v2076
        %v2230 = vunpack.c.h.b16 %v2076
        %v2231 = vunpack.c.l.b16 %v2077
        %v2232 = vunpack.c.h.b16 %v2077
        %v2233 = vunpack.c.l.b16 %v2078
        %v2234 = vunpack.c.h.b16 %v2078
        %v2235 = vunpack.c.l.b16 %v2079
        %v2236 = vunpack.c.h.b16 %v2079
        %v2237 = vunpack.c.l.b16 %v2080
        %v2238 = vunpack.c.h.b16 %v2080
        %v2239 = vunpack.c.l.b16 %v2081
        %v2240 = vunpack.c.h.b16 %v2081
        %v2241 = vunpack.c.l.b16 %v2082
        %v2242 = vunpack.c.h.b16 %v2082
        %v2243 = vunpack.c.l.b16 %v2083
        %v2244 = vunpack.c.h.b16 %v2083
        %v2245 = vunpack.c.l.b16 %v2084
        %v2246 = vunpack.c.h.b16 %v2084
        %v2247 = vunpack.c.l.b16 %v2085
        %v2248 = vunpack.c.h.b16 %v2085
        %v2249 = vunpack.c.l.b16 %v2086
        %v2250 = vunpack.c.h.b16 %v2086
        %v2251 = vunpack.c.l.b16 %v2087
        %v2252 = vunpack.c.h.b16 %v2087
        %v2253 = vunpack.c.l.b16 %v2088
        %v2254 = vunpack.c.h.b16 %v2088
        %v2255 = vunpack.c.l.b16 %v2089
        %v2256 = vunpack.c.h.b16 %v2089
        %v2257 = vunpack.c.l.b16 %v2090
        %v2258 = vunpack.c.h.b16 %v2090
        %v2259 = vunpack.c.l.b16 %v2091
        %v2260 = vunpack.c.h.b16 %v2091
        %v2261 = vunpack.c.l.b16 %v2092
        %v2262 = vunpack.c.h.b16 %v2092
        %v2263 = vunpack.c.l.b16 %v2093
        %v2264 = vunpack.c.h.b16 %v2093
        %v2265 = vunpack.c.l.b16 %v2094
        %v2266 = vunpack.c.h.b16 %v2094
        %v2267 = vunpack.c.l.b16 %v2095
        %v2268 = vunpack.c.h.b16 %v2095
        %v2269 = vunpack.c.l.b16 %v2096
        %v2270 = vunpack.c.h.b16 %v2096
        %v2271 = vunpack.c.l.b16 %v2097
        %v2272 = vunpack.c.h.b16 %v2097
        %v2273 = vunpack.c.l.b16 %v2098
        %v2274 = vunpack.c.h.b16 %v2098
        %v2275 = vunpack.c.l.b16 %v2099
        %v2276 = vunpack.c.h.b16 %v2099
        %v2277 = vunpack.c.l.b16 %v2100
        %v2278 = vunpack.c.h.b16 %v2100
        %v2279 = vunpack.c.l.b16 %v2101
        %v2280 = vunpack.c.h.b16 %v2101
        %v2281 = vunpack.c.l.b16 %v2102
        %v2282 = vunpack.c.h.b16 %v2102
        %v2283 = vunpack.c.l.b16 %v2103
        %v2284 = vunpack.c.h.b16 %v2103
        %v2285 = vunpack.c.l.b16 %v2104
        %v2286 = vunpack.c.h.b16 %v2104
        %v2287 = vunpack.c.l.b16 %v2105
        %v2288 = vunpack.c.h.b16 %v2105
        %v2289 = vunpack.c.l.b16 %v2106
        %v2290 = vunpack.c.h.b16 %v2106
        %v2291 = vunpack.c.l.b16 %v2107
        %v2292 = vunpack.c.h.b16 %v2107
        %v2293 = vunpack.c.l.b16 %v2108
        %v2294 = vunpack.c.h.b16 %v2108
        %v2295 = vunpack.c.l.b16 %v2109
        %v2296 = vunpack.c.h.b16 %v2109
        %v2297 = vunpack.c.l.b16 %v2110
        %v2298 = vunpack.c.h.b16 %v2110
        %v2299 = vunpack.c.l.b16 %v2111
        %v2300 = vunpack.c.h.b16 %v2111
        %v2301 = vunpack.c.l.b16 %v2112
        %v2302 = vunpack.c.h.b16 %v2112
        %v2303 = vunpack.c.l.b16 %v2113
        %v2304 = vunpack.c.h.b16 %v2113
        %v2305 = vunpack.c.l.b16 %v2114
        %v2306 = vunpack.c.h.b16 %v2114
        %v2307 = vunpack.c.l.b16 %v2115
        %v2308 = vunpack.c.h.b16 %v2115
        %v2309 = vunpack.c.l.b16 %v2116
        %v2310 = vunpack.c.h.b16 %v2116
        %v2311 = vunpack.c.l.b16 %v2117
        %v2312 = vunpack.c.h.b16 %v2117
        %v2313 = vunpack.c.l.b16 %v2118
        %v2314 = vunpack.c.h.b16 %v2118
        %v2315 = vunpack.c.l.b16 %v2119
        %v2316 = vunpack.c.h.b16 %v2119
        %v2317 = vunpack.c.l.b16 %v2120
        %v2318 = vunpack.c.h.b16 %v2120
        %v2319 = vunpack.c.l.b16 %v2121
        %v2320 = vunpack.c.h.b16 %v2121
        %v2321 = vunpack.c.l.b16 %v2122
        %v2322 = vunpack.c.h.b16 %v2122
        %v2323 = vunpack.c.l.b16 %v2123
        %v2324 = vunpack.c.h.b16 %v2123
        %v2325 = vunpack.c.l.b16 %v2124
        %v2326 = vunpack.c.h.b16 %v2124
        %v2327 = vunpack.c.l.b16 %v2125
        %v2328 = vunpack.c.h.b16 %v2125
        %v2329 = vunpack.c.l.b16 %v2126
        %v2330 = vunpack.c.h.b16 %v2126
        %v2331 = vpack.c.b16 %v2205, %v2203
        %v2332 = vpack.c.b16 %v2206, %v2204
        %v2333 = vpack.c.b16 %v2209, %v2207
        %v2334 = vpack.c.b16 %v2210, %v2208
        %v2335 = vpack.c.b16 %v2213, %v2211
        %v2336 = vpack.c.b16 %v2214, %v2212
        %v2337 = vpack.c.b16 %v2217, %v2215
        %v2338 = vpack.c.b16 %v2218, %v2216
        %v2339 = vpack.c.b16 %v2221, %v2219
        %v2340 = vpack.c.b16 %v2222, %v2220
        %v2341 = vpack.c.b16 %v2225, %v2223
        %v2342 = vpack.c.b16 %v2226, %v2224
        %v2343 = vpack.c.b16 %v2229, %v2227
        %v2344 = vpack.c.b16 %v2230, %v2228
        %v2345 = vpack.c.b16 %v2233, %v2231
        %v2346 = vpack.c.b16 %v2234, %v2232
        %v2347 = vpack.c.b16 %v2237, %v2235
        %v2348 = vpack.c.b16 %v2238, %v2236
        %v2349 = vpack.c.b16 %v2241, %v2239
        %v2350 = vpack.c.b16 %v2242, %v2240
        %v2351 = vpack.c.b16 %v2245, %v2243
        %v2352 = vpack.c.b16 %v2246, %v2244
        %v2353 = vpack.c.b16 %v2249, %v2247
        %v2354 = vpack.c.b16 %v2250, %v2248
        %v2355 = vpack.c.b16 %v2253, %v2251
        %v2356 = vpack.c.b16 %v2254, %v2252
        %v2357 = vpack.c.b16 %v2257, %v2255
        %v2358 = vpack.c.b16 %v2258, %v2256
        %v2359 = vpack.c.b16 %v2261, %v2259
        %v2360 = vpack.c.b16 %v2262, %v2260
        %v2361 = vpack.c.b16 %v2265, %v2263
        %v2362 = vpack.c.b16 %v2266, %v2264
        %v2363 = vpack.c.b16 %v2269, %v2267
        %v2364 = vpack.c.b16 %v2270, %v2268
        %v2365 = vpack.c.b16 %v2273, %v2271
        %v2366 = vpack.c.b16 %v2274, %v2272
        %v2367 = vpack.c.b16 %v2277, %v2275
        %v2368 = vpack.c.b16 %v2278, %v2276
        %v2369 = vpack.c.b16 %v2281, %v2279
        %v2370 = vpack.c.b16 %v2282, %v2280
        %v2371 = vpack.c.b16 %v2285, %v2283
        %v2372 = vpack.c.b16 %v2286, %v2284
        %v2373 = vpack.c.b16 %v2289, %v2287
        %v2374 = vpack.c.b16 %v2290, %v2288
        %v2375 = vpack.c.b16 %v2293, %v2291
        %v2376 = vpack.c.b16 %v2294, %v2292
        %v2377 = vpack.c.b16 %v2297, %v2295
        %v2378 = vpack.c.b16 %v2298, %v2296
        %v2379 = vpack.c.b16 %v2301, %v2299
        %v2380 = vpack.c.b16 %v2302, %v2300
        %v2381 = vpack.c.b16 %v2305, %v2303
        %v2382 = vpack.c.b16 %v2306, %v2304
        %v2383 = vpack.c.b16 %v2309, %v2307
        %v2384 = vpack.c.b16 %v2310, %v2308
        %v2385 = vpack.c.b16 %v2313, %v2311
        %v2386 = vpack.c.b16 %v2314, %v2312
        %v2387 = vpack.c.b16 %v2317, %v2315
        %v2388 = vpack.c.b16 %v2318, %v2316
        %v2389 = vpack.c.b16 %v2321, %v2319
        %v2390 = vpack.c.b16 %v2322, %v2320
        %v2391 = vpack.c.b16 %v2325, %v2323
        %v2392 = vpack.c.b16 %v2326, %v2324
        %v2393 = vpack.c.b16 %v2329, %v2327
        %v2394 = vpack.c.b16 %v2330, %v2328
        %2459 = vmatprep.subr.bf16.mxu0 %v2332
        %2460 = vmatpush1.bf16.msra.mxu0 %v2331
        %2461 = vmatprep.subr.bf16.mxu0 %v2334
        %2462 = vmatpush1.bf16.msra.mxu0 %v2333
        %2463 = vmatprep.subr.bf16.mxu0 %v2336
        %2464 = vmatpush1.bf16.msra.mxu0 %v2335
        %2465 = vmatprep.subr.bf16.mxu0 %v2338
        %2466 = vmatpush1.bf16.msra.mxu0 %v2337
        %2467 = vmatprep.subr.bf16.mxu0 %v2340
        %2468 = vmatpush1.bf16.msra.mxu0 %v2339
        %2469 = vmatprep.subr.bf16.mxu0 %v2342
        %2470 = vmatpush1.bf16.msra.mxu0 %v2341
        %2471 = vmatprep.subr.bf16.mxu0 %v2344
        %2472 = vmatpush1.bf16.msra.mxu0 %v2343
        %2473 = vmatprep.subr.bf16.mxu0 %v2346
        %2474 = vmatpush1.bf16.msra.mxu0 %v2345
        %2475 = vmatprep.subr.bf16.mxu0 %v2348
        %2476 = vmatpush1.bf16.msra.mxu0 %v2347
        %2477 = vmatprep.subr.bf16.mxu0 %v2350
        %2478 = vmatpush1.bf16.msra.mxu0 %v2349
        %2479 = vmatprep.subr.bf16.mxu0 %v2352
        %2480 = vmatpush1.bf16.msra.mxu0 %v2351
        %2481 = vmatprep.subr.bf16.mxu0 %v2354
        %2482 = vmatpush1.bf16.msra.mxu0 %v2353
        %2483 = vmatprep.subr.bf16.mxu0 %v2356
        %2484 = vmatpush1.bf16.msra.mxu0 %v2355
        %2485 = vmatprep.subr.bf16.mxu0 %v2358
        %2486 = vmatpush1.bf16.msra.mxu0 %v2357
        %2487 = vmatprep.subr.bf16.mxu0 %v2360
        %2488 = vmatpush1.bf16.msra.mxu0 %v2359
        %2489 = vmatprep.subr.bf16.mxu0 %v2362
        %2490 = vmatpush1.bf16.msra.mxu0 %v2361
        %2491 = vmatprep.mubr.bf16.mxu0 %v2060
        %2492 = vmatmul.mubr.bf16.gmra.mrb[0].mxu0 %v2059
        %v2493 = vpop.f32.mrb[0].mxu0
        %v2494 = vadd.f32 %v2132, %v2493
        %v2495 = vpop.f32.mrb[0].mxu0
        %v2496 = vadd.f32 %v2136, %v2495
        %v2497 = vpop.f32.mrb[0].mxu0
        %v2498 = vpop.f32.mrb[0].mxu0
        %2499 = vdwg.mxu0
        %2500 = vmatprep.subr.bf16.mxu0 %v2364
        %2501 = vmatpush1.bf16.msra.mxu0 %v2363
        %2502 = vmatprep.subr.bf16.mxu0 %v2366
        %2503 = vmatpush1.bf16.msra.mxu0 %v2365
        %2504 = vmatprep.subr.bf16.mxu0 %v2368
        %2505 = vmatpush1.bf16.msra.mxu0 %v2367
        %2506 = vmatprep.subr.bf16.mxu0 %v2370
        %2507 = vmatpush1.bf16.msra.mxu0 %v2369
        %2508 = vmatprep.subr.bf16.mxu0 %v2372
        %2509 = vmatpush1.bf16.msra.mxu0 %v2371
        %2510 = vmatprep.subr.bf16.mxu0 %v2374
        %2511 = vmatpush1.bf16.msra.mxu0 %v2373
        %2512 = vmatprep.subr.bf16.mxu0 %v2376
        %2513 = vmatpush1.bf16.msra.mxu0 %v2375
        %2514 = vmatprep.subr.bf16.mxu0 %v2378
        %2515 = vmatpush1.bf16.msra.mxu0 %v2377
        %2516 = vmatprep.subr.bf16.mxu0 %v2380
        %2517 = vmatpush1.bf16.msra.mxu0 %v2379
        %2518 = vmatprep.subr.bf16.mxu0 %v2382
        %2519 = vmatpush1.bf16.msra.mxu0 %v2381
        %2520 = vmatprep.subr.bf16.mxu0 %v2384
        %2521 = vmatpush1.bf16.msra.mxu0 %v2383
        %2522 = vmatprep.subr.bf16.mxu0 %v2386
        %2523 = vmatpush1.bf16.msra.mxu0 %v2385
        %2524 = vmatprep.subr.bf16.mxu0 %v2388
        %2525 = vmatpush1.bf16.msra.mxu0 %v2387
        %2526 = vmatprep.subr.bf16.mxu0 %v2390
        %2527 = vmatpush1.bf16.msra.mxu0 %v2389
        %2528 = vmatprep.subr.bf16.mxu0 %v2392
        %2529 = vmatpush1.bf16.msra.mxu0 %v2391
        %2530 = vmatprep.subr.bf16.mxu0 %v2394
        %2531 = vmatpush1.bf16.msra.mxu0 %v2393
        %2532 = vmatprep.mubr.bf16.mxu0 %v2062
        %2533 = vmatmul.mubr.bf16.gmra.mrb[0].mxu0 %v2061
        %v2534 = vpop.f32.mrb[0].mxu0
        %v2535 = vadd.f32 %v2494, %v2534
        %v2536 = vpop.f32.mrb[0].mxu0
        %v2537 = vadd.f32 %v2496, %v2536
        %v2538 = vpop.f32.mrb[0].mxu0
        %v2539 = vpop.f32.mrb[0].mxu0
        %2540 = vdwg.mxu0
        %v2541 = vmax.f32 %v2535, 0.0
        %v2542 = vmax.f32 %v2537, 0.0
        %v2543 = vpack.c.bf16 %v2541, %v2541
        %v2544 = vpack.c.bf16 %v2542, %v2542
        %v2545 = vld [vmem:[%s5] sm:$0xf]
        %v2546 = vld [vmem:[%s5 + $0x4] sm:$0xf]
        %v2547 = vld [vmem:[%s5 + $0x8] sm:$0xf]
        %v2548 = vld [vmem:[%s5 + $0xc] sm:$0xf]
        %v2549 = vld [vmem:[%s5 + $0x10] sm:$0xf]
        %v2550 = vld [vmem:[%s5 + $0x14] sm:$0xf]
        %v2551 = vld [vmem:[%s5 + $0x18] sm:$0xf]
        %v2552 = vld [vmem:[%s5 + $0x1c] sm:$0xf]
        %v2553 = vld [vmem:[%s5 + $0x20] sm:$0xf]
        %v2554 = vld [vmem:[%s5 + $0x24] sm:$0xf]
        %v2555 = vld [vmem:[%s5 + $0x28] sm:$0xf]
        %v2556 = vld [vmem:[%s5 + $0x2c] sm:$0xf]
        %v2557 = vld [vmem:[%s5 + $0x30] sm:$0xf]
        %v2558 = vld [vmem:[%s5 + $0x34] sm:$0xf]
        %v2559 = vld [vmem:[%s5 + $0x38] sm:$0xf]
        %v2560 = vld [vmem:[%s5 + $0x3c] sm:$0xf]
        %v2561 = vld [vmem:[%s5 + $0x40] sm:$0xf]
        %v2562 = vld [vmem:[%s5 + $0x44] sm:$0xf]
        %v2563 = vld [vmem:[%s5 + $0x48] sm:$0xf]
        %v2564 = vld [vmem:[%s5 + $0x4c] sm:$0xf]
        %v2565 = vld [vmem:[%s5 + $0x50] sm:$0xf]
        %v2566 = vld [vmem:[%s5 + $0x54] sm:$0xf]
        %v2567 = vld [vmem:[%s5 + $0x58] sm:$0xf]
        %v2568 = vld [vmem:[%s5 + $0x5c] sm:$0xf]
        %v2569 = vld [vmem:[%s5 + $0x60] sm:$0xf]
        %v2570 = vld [vmem:[%s5 + $0x64] sm:$0xf]
        %v2571 = vld [vmem:[%s5 + $0x68] sm:$0xf]
        %v2572 = vld [vmem:[%s5 + $0x6c] sm:$0xf]
        %v2573 = vld [vmem:[%s5 + $0x70] sm:$0xf]
        %v2574 = vld [vmem:[%s5 + $0x74] sm:$0xf]
        %v2575 = vld [vmem:[%s5 + $0x78] sm:$0xf]
        %v2576 = vld [vmem:[%s5 + $0x7c] sm:$0xf]
        %v2577 = vld [vmem:[%s6] sm:$0x1]
        %v2579 = vlaneseq
        %v2580 = vshrl.u32 %v2579, 7
        %v2581 = vsub.s32 0, %v2580
        %v2582 = vrot.slane %v2577, %v2581
        %v2616 = vunpack.c.l.b16 %v2545
        %v2617 = vunpack.c.l.b16 %v2546
        %v2618 = vunpack.c.l.b16 %v2547
        %v2619 = vunpack.c.l.b16 %v2548
        %v2620 = vunpack.c.l.b16 %v2549
        %v2621 = vunpack.c.l.b16 %v2550
        %v2622 = vunpack.c.l.b16 %v2551
        %v2623 = vunpack.c.l.b16 %v2552
        %v2624 = vunpack.c.l.b16 %v2553
        %v2625 = vunpack.c.l.b16 %v2554
        %v2626 = vunpack.c.l.b16 %v2555
        %v2627 = vunpack.c.l.b16 %v2556
        %v2628 = vunpack.c.l.b16 %v2557
        %v2629 = vunpack.c.l.b16 %v2558
        %v2630 = vunpack.c.l.b16 %v2559
        %v2631 = vunpack.c.l.b16 %v2560
        %v2632 = vunpack.c.l.b16 %v2561
        %v2633 = vunpack.c.l.b16 %v2562
        %v2634 = vunpack.c.l.b16 %v2563
        %v2635 = vunpack.c.l.b16 %v2564
        %v2636 = vunpack.c.l.b16 %v2565
        %v2637 = vunpack.c.l.b16 %v2566
        %v2638 = vunpack.c.l.b16 %v2567
        %v2639 = vunpack.c.l.b16 %v2568
        %v2640 = vunpack.c.l.b16 %v2569
        %v2641 = vunpack.c.l.b16 %v2570
        %v2642 = vunpack.c.l.b16 %v2571
        %v2643 = vunpack.c.l.b16 %v2572
        %v2644 = vunpack.c.l.b16 %v2573
        %v2645 = vunpack.c.l.b16 %v2574
        %v2646 = vunpack.c.l.b16 %v2575
        %v2647 = vunpack.c.l.b16 %v2576
        %v2648 = vpack.c.b16 %v2617, %v2616
        %v2649 = vpack.c.b16 %v2619, %v2618
        %v2650 = vpack.c.b16 %v2621, %v2620
        %v2651 = vpack.c.b16 %v2623, %v2622
        %v2652 = vpack.c.b16 %v2625, %v2624
        %v2653 = vpack.c.b16 %v2627, %v2626
        %v2654 = vpack.c.b16 %v2629, %v2628
        %v2655 = vpack.c.b16 %v2631, %v2630
        %v2656 = vpack.c.b16 %v2633, %v2632
        %v2657 = vpack.c.b16 %v2635, %v2634
        %v2658 = vpack.c.b16 %v2637, %v2636
        %v2659 = vpack.c.b16 %v2639, %v2638
        %v2660 = vpack.c.b16 %v2641, %v2640
        %v2661 = vpack.c.b16 %v2643, %v2642
        %v2662 = vpack.c.b16 %v2645, %v2644
        %v2663 = vpack.c.b16 %v2647, %v2646
        %2680 = vmatprep.subr.bf16.mxu0 0
        %2681 = vmatpush1.bf16.msra.mxu0 %v2648
        %2682 = vmatprep.subr.bf16.mxu0 0
        %2683 = vmatpush1.bf16.msra.mxu0 %v2649
        %2684 = vmatprep.subr.bf16.mxu0 0
        %2685 = vmatpush1.bf16.msra.mxu0 %v2650
        %2686 = vmatprep.subr.bf16.mxu0 0
        %2687 = vmatpush1.bf16.msra.mxu0 %v2651
        %2688 = vmatprep.subr.bf16.mxu0 0
        %2689 = vmatpush1.bf16.msra.mxu0 %v2652
        %2690 = vmatprep.subr.bf16.mxu0 0
        %2691 = vmatpush1.bf16.msra.mxu0 %v2653
        %2692 = vmatprep.subr.bf16.mxu0 0
        %2693 = vmatpush1.bf16.msra.mxu0 %v2654
        %2694 = vmatprep.subr.bf16.mxu0 0
        %2695 = vmatpush1.bf16.msra.mxu0 %v2655
        %2696 = vmatprep.subr.bf16.mxu0 0
        %2697 = vmatpush1.bf16.msra.mxu0 %v2656
        %2698 = vmatprep.subr.bf16.mxu0 0
        %2699 = vmatpush1.bf16.msra.mxu0 %v2657
        %2700 = vmatprep.subr.bf16.mxu0 0
        %2701 = vmatpush1.bf16.msra.mxu0 %v2658
        %2702 = vmatprep.subr.bf16.mxu0 0
        %2703 = vmatpush1.bf16.msra.mxu0 %v2659
        %2704 = vmatprep.subr.bf16.mxu0 0
        %2705 = vmatpush1.bf16.msra.mxu0 %v2660
        %2706 = vmatprep.subr.bf16.mxu0 0
        %2707 = vmatpush1.bf16.msra.mxu0 %v2661
        %2708 = vmatprep.subr.bf16.mxu0 0
        %2709 = vmatpush1.bf16.msra.mxu0 %v2662
        %2710 = vmatprep.subr.bf16.mxu0 0
        %2711 = vmatpush1.bf16.msra.mxu0 %v2663
        %2712 = vmatprep.mubr.bf16.mxu0 %v2544
        %2713 = vmatmul.mubr.bf16.gmra.mrb[0].mxu0 %v2543
        %v2714 = vpop.f32.mrb[0].mxu0
        %v2715 = vadd.f32 %v2582, %v2714
        %v2716 = vpop.f32.mrb[0].mxu0
        %v2717 = vpop.f32.mrb[0].mxu0
        %v2718 = vpop.f32.mrb[0].mxu0
        %2719 = vdwg.mxu0
        %v2720 = vmax.f32 %v2715, 0.0
        %v2721 = vpack.c.bf16 %v2720, %v2720
        %v2722 = vld [vmem:[%s7] sm:$0xf]
        %v2723 = vld [vmem:[%s7 + $0x4] sm:$0xf]
        %v2724 = vld [vmem:[%s7 + $0x8] sm:$0xf]
        %v2725 = vld [vmem:[%s7 + $0xc] sm:$0xf]
        %v2726 = vld [vmem:[%s7 + $0x10] sm:$0xf]
        %v2727 = vld [vmem:[%s7 + $0x14] sm:$0xf]
        %v2728 = vld [vmem:[%s7 + $0x18] sm:$0xf]
        %v2729 = vld [vmem:[%s7 + $0x1c] sm:$0xf]
        %v2730 = vld [vmem:[%s7 + $0x20] sm:$0xf]
        %v2731 = vld [vmem:[%s7 + $0x24] sm:$0xf]
        %v2732 = vld [vmem:[%s7 + $0x28] sm:$0xf]
        %v2733 = vld [vmem:[%s7 + $0x2c] sm:$0xf]
        %v2734 = vld [vmem:[%s7 + $0x30] sm:$0xf]
        %v2735 = vld [vmem:[%s7 + $0x34] sm:$0xf]
        %v2736 = vld [vmem:[%s7 + $0x38] sm:$0xf]
        %v2737 = vld [vmem:[%s7 + $0x3c] sm:$0xf]
        %v2738 = vld [vmem:[%s8] sm:$0x1]
        %v2740 = vlaneseq
        %v2741 = vshrl.u32 %v2740, 7
        %v2742 = vsub.s32 0, %v2741
        %v2743 = vrot.slane %v2738, %v2742
        %v2761 = vunpack.c.l.b16 %v2722
        %v2762 = vunpack.c.l.b16 %v2723
        %v2763 = vunpack.c.l.b16 %v2724
        %v2764 = vunpack.c.l.b16 %v2725
        %v2765 = vunpack.c.l.b16 %v2726
        %v2766 = vunpack.c.l.b16 %v2727
        %v2767 = vunpack.c.l.b16 %v2728
        %v2768 = vunpack.c.l.b16 %v2729
        %v2769 = vunpack.c.l.b16 %v2730
        %v2770 = vunpack.c.l.b16 %v2731
        %v2771 = vunpack.c.l.b16 %v2732
        %v2772 = vunpack.c.l.b16 %v2733
        %v2773 = vunpack.c.l.b16 %v2734
        %v2774 = vunpack.c.l.b16 %v2735
        %v2775 = vunpack.c.l.b16 %v2736
        %v2776 = vunpack.c.l.b16 %v2737
        %v2777 = vpack.c.b16 %v2762, %v2761
        %v2778 = vpack.c.b16 %v2764, %v2763
        %v2779 = vpack.c.b16 %v2766, %v2765
        %v2780 = vpack.c.b16 %v2768, %v2767
        %v2781 = vpack.c.b16 %v2770, %v2769
        %v2782 = vpack.c.b16 %v2772, %v2771
        %v2783 = vpack.c.b16 %v2774, %v2773
        %v2784 = vpack.c.b16 %v2776, %v2775
        %2793 = vmatprep.subr.bf16.mxu0 0
        %2794 = vmatpush1.bf16.msra.mxu0 %v2777
        %2795 = vmatprep.subr.bf16.mxu0 0
        %2796 = vmatpush1.bf16.msra.mxu0 %v2778
        %2797 = vmatprep.subr.bf16.mxu0 0
        %2798 = vmatpush1.bf16.msra.mxu0 %v2779
        %2799 = vmatprep.subr.bf16.mxu0 0
        %2800 = vmatpush1.bf16.msra.mxu0 %v2780
        %2801 = vmatprep.subr.bf16.mxu0 0
        %2802 = vmatpush1.bf16.msra.mxu0 %v2781
        %2803 = vmatprep.subr.bf16.mxu0 0
        %2804 = vmatpush1.bf16.msra.mxu0 %v2782
        %2805 = vmatprep.subr.bf16.mxu0 0
        %2806 = vmatpush1.bf16.msra.mxu0 %v2783
        %2807 = vmatprep.subr.bf16.mxu0 0
        %2808 = vmatpush1.bf16.msra.mxu0 %v2784
        %2809 = vmatprep.subr.bf16.mxu0 0
        %2810 = vmatpush1.bf16.msra.mxu0 0
        %2811 = vmatprep.subr.bf16.mxu0 0
        %2812 = vmatpush1.bf16.msra.mxu0 0
        %2813 = vmatprep.subr.bf16.mxu0 0
        %2814 = vmatpush1.bf16.msra.mxu0 0
        %2815 = vmatprep.subr.bf16.mxu0 0
        %2816 = vmatpush1.bf16.msra.mxu0 0
        %2817 = vmatprep.subr.bf16.mxu0 0
        %2818 = vmatpush1.bf16.msra.mxu0 0
        %2819 = vmatprep.subr.bf16.mxu0 0
        %2820 = vmatpush1.bf16.msra.mxu0 0
        %2821 = vmatprep.subr.bf16.mxu0 0
        %2822 = vmatpush1.bf16.msra.mxu0 0
        %2823 = vmatprep.subr.bf16.mxu0 0
        %2824 = vmatpush1.bf16.msra.mxu0 0
        %2825 = vmatprep.mubr.bf16.mxu0 0
        %2826 = vmatmul.mubr.bf16.gmra.mrb[0].mxu0 %v2721
        %v2827 = vpop.f32.mrb[0].mxu0
        %v2828 = vadd.f32 %v2743, %v2827
        %v2829 = vpop.f32.mrb[0].mxu0
        %v2830 = vpop.f32.mrb[0].mxu0
        %v2831 = vpop.f32.mrb[0].mxu0
        %2832 = vdwg.mxu0
        %v2833 = vlaneseq
        %v2834 = vand.u32 %v2833, 127
        %vm2835 = vcmp.lt.s32.totalorder %v2834, 10
        %v2836 = vsel %vm2835, %v2828, -inf
        %2837 = vmax.xlane.f32.xlu0 %v2836
        %v2838 = vpop.xlane.xlu0 %2837
        %v2839 = vsub.f32 %v2836, %v2838
        %v2840 = vmul.f32 %v2839, 1.442695
        %v2841 = vpow.pop %v2840
        %2842 = vadd.xlane.f32.xlu0 %v2841
        %v2843 = vpop.xlane.xlu0 %2842
        %v2844 = vrcp.pop %v2843
        %v2845 = vmul.f32 %v2841, %v2844
        %2846 = vst [vmem:[%s325] sm:$0xff] %v2845
        %s2847 = sand.u32 %s225, 1
        %s2848 = scalar_lea.sflag [#allocation3], %s2847
        %s2849 = sand.u32 %s225, 1
        %s2850 = smul.addr %s2849, 8
        %s2851 = scalar_lea.vmem [#allocation2], %s2850
        // Predicated region
        $region57: #{mlp_forward.1} parent=55 // pred_check
          %p2852 = pneg %p235
        $region58: #{mlp_forward.1} parent=55 // pred_check_branch
          %2854 = sbr.rel (%p2852) target = $region60
        $region59: #{mlp_forward.1} parent=55 // pred_region
          %s2856 = ssub.s32 128, 128
          %2857 = vsyncadd %s2848, %s2856
          %s2858 = smul.addr %s23, 128
          %s2859 = scalar_lea.hbm %s9, %s2858
          %s2861 = sshll.u32 %s2851, 4
          %s2862 = int_to_ptr.vmem [resolvable:$true] %s2861
          %2864 = dma.vmem_to_hbm [thread:$0]  %s2862, 128, %s2859, %s2848
        $region60: #{mlp_forward.1} parent=55 // pred_fallthru
          _
      $region56: #{mlp_forward.1} parent=5 // pred_fallthru
        _
      %p2865 = scmp.le.s32.totalorder 2, %s18
      // Predicated region
      $region61: #{mlp_forward.1} parent=5 // pred_check
        %p2866 = pneg %p2865
      $region62: #{mlp_forward.1} parent=5 // pred_check_branch
        %2868 = sbr.rel (%p2866) target = $region64
      $region63: #{mlp_forward.1} parent=5 // pred_region
        %s2869 = ssub.s32 %s18, 2
        // Predicated region
        $region65: #{mlp_forward.1} parent=63 // pred_check
          %p2870 = pneg %p241
        $region66: #{mlp_forward.1} parent=63 // pred_check_branch
          %2872 = sbr.rel (%p2870) target = $region68
        $region67: #{mlp_forward.1} parent=63 // pred_region
          %s2873 = sand.u32 %s226, 1
          %s2874 = scalar_lea.sflag [#allocation3], %s2873
          %s2875 = sand.u32 %s226, 1
          %s2876 = smul.addr %s2875, 8
          %s2877 = scalar_lea.vmem [#allocation2], %s2876
          %2878 = dma.done %s2874, 128
        $region68: #{mlp_forward.1} parent=63 // pred_fallthru
          _
      $region64: #{mlp_forward.1} parent=5 // pred_fallthru
        _
    $region6: #{mlp_forward.1} parent=1 // loop_footer
      %s22 = sadd.s32 1, %s18
    $region7: #{mlp_forward.1} parent=1 // loop_footer_branch
      %17 = sbr.rel target = $region3
    $region8: #{mlp_forward.1} parent=1 // loop_exit
      _
    %2879 = vsyncpa [#allocation3], 1
    %s2880 = scalar_lea.sflag [#allocation3], 1
    %2881 = vsyncpa %s2880, 1

</llo_original>
